<compile_context>
chip_gen: v5e
topology: v5e:2x2
jax: 0.10.0
libtpu: 0.0.40
codegen_flags: <defaults>
</compile_context>

<pallas_src>
import jax
import jax.numpy as jnp
from jax import lax
from jax.experimental import pallas as pl
from jax.experimental.pallas import tpu as pltpu

LRELU = 0.1


# --------------------------------- kernel -----------------------------------

def _make_erb_kernel(H, W, Bt, RC):
    HW = H * W
    L = Bt * HW

    def kernel(x_ref, mask_ref,
               we1, be1, wf1, bm1, wr1, br1,
               we2, be2, wf2, bm2, wr2, br2,
               o_ref, im2col_ref):
        # Fold the Bt images of this grid step onto the lane axis -> (C, L).
        # Lane-aligned concat (offsets are multiples of HW).
        if Bt == 1:
            x = x_ref[0]
        else:
            x = jnp.concatenate([x_ref[b] for b in range(Bt)], axis=1)

        def rrrb(inp, we_t, be, wf_f, bmap, wr_t, br):
            # expand_conv (1x1): (RC, C) @ (C, L) + bias
            expanded = jnp.dot(we_t[...], inp,
                               preferred_element_type=jnp.float32) + be[...]

            # fea_conv (3x3 on the bias-padded tensor): build the 9 shifted
            # taps directly into the (9*RC, L) VMEM scratch.  Out-of-image
            # positions are zeroed by the precomputed mask; their pad_tensor
            # bias contribution is pre-folded into `bmap`.  NOTE: pltpu.roll
            # wraps across image boundaries on the folded L axis — every
            # off-center tap MUST stay masked for correctness.
            for t in range(9):
                dy, dx = t // 3 - 1, t % 3 - 1
                if dy == 0 and dx == 0:
                    im2col_ref[pl.ds(t * RC, RC), :] = expanded
                else:
                    shift = (-(dy * W + dx)) % L
                    j = t if t < 4 else t - 1           # row in the (8, L) mask
                    m = mask_ref[pl.ds(j, 1), :]        # (1, L) of {0, 1}
                    im2col_ref[pl.ds(t * RC, RC), :] = (
                        pltpu.roll(expanded, shift, 1) * m)

            # single MXU contraction; wf_f already carries the identity on
            # the center tap (the "+ out_identity") and bmap carries
            # fea bias + border bias.
            fea = jnp.dot(wf_f[...], im2col_ref[...],
                          preferred_element_type=jnp.float32) + bmap[...]

            # reduce_conv (1x1) + bias + input residual
            return (jnp.dot(wr_t[...], fea,
                            preferred_element_type=jnp.float32)
                    + br[...] + inp)

        o1 = rrrb(x, we1, be1, wf1, bm1, wr1, br1)
        o1 = jnp.where(o1 >= 0, o1, LRELU * o1)          # LeakyReLU(0.1)
        o2 = rrrb(o1, we2, be2, wf2, bm2, wr2, br2)

        # Lane-aligned split back into per-image (C, HW) stores.
        if Bt == 1:
            o_ref[0] = o2
        else:
            for b in range(Bt):
                o_ref[b] = o2[:, b * HW:(b + 1) * HW]

    return kernel


# ------------------------------- wrapper -------------------------------------

def _make_tap_masks(H, W, Bt):
    """(8, L) f32 validity masks for the 8 off-center 3x3 taps (1=in-image)."""
    HW = H * W
    L = Bt * HW
    pos = jnp.arange(L, dtype=jnp.int32) % HW
    yy = pos // W
    xx = pos % W
    rows = []
    for t in range(9):
        if t == 4:
            continue
        dy, dx = t // 3 - 1, t % 3 - 1
        v = (((yy + dy) >= 0) & ((yy + dy) <= H - 1) &
             ((xx + dx) >= 0) & ((xx + dx) <= W - 1))
        rows.append(v)
    return jnp.stack(rows, axis=0).astype(jnp.float32)


def _prepare_kernel_params(params, masks):
    """Transpose / fuse the PyTorch-layout params for the (C, L) kernel layout.

    Per RRRB produces:
      we.T (RC, C), be (RC, 1),
      wf_flat (RC, 9*RC) with the identity fused into the center tap,
      bmap (RC, L) = fea bias + pad_tensor border-bias contribution,
      wr.T (C, RC), br (C, 1).
    """
    kp = []
    off_taps = [t for t in range(9) if t != 4]
    for i in range(2):
        we, be, wf, bf, wr, br = params[6 * i:6 * i + 6]
        C, RC = we.shape
        be_v = be.reshape(RC)
        bf_v = bf.reshape(RC)
        wf_t = jnp.transpose(wf, (2, 0, 1))               # (out, tap, in)
        # fuse "+ out_identity" into the center tap of the 3x3 weight
        wf_fused = wf_t.at[:, 4, :].add(jnp.eye(RC, dtype=wf.dtype))
        wf_flat = wf_fused.reshape(RC, 9 * RC)
        # border-bias map: bf + sum_{t != center} (W_t @ be) * (1 - mask_t)
        wtb = jnp.stack([wf_t[:, t, :] @ be_v for t in off_taps], axis=1)  # (RC, 8)
        bmap = bf_v.reshape(RC, 1) + wtb @ (1.0 - masks)                   # (RC, L)
        kp += [we.T, be.reshape(RC, 1), wf_flat, bmap, wr.T, br.reshape(C, 1)]
    return kp


def _pick_batch_tile(N, C, RC, HW, vmem_budget=12 << 20, max_bt=64):
    """Largest batch-fold tile that fits a conservative VMEM working-set
    budget (sized for v7x's smaller VMEM), capped so the batch grid axis has
    length >= 2 (lets the 'parallel' axis split across v7x's two TCs)."""
    # per-Bt f32 bytes: 4 pipelined in/out blocks + folded x / o1 / o2
    # + im2col scratch + ~6 (RC,L) temporaries & bias maps + (8,L) masks
    bytes_per_bt = 4 * HW * (7 * C + 15 * RC + 8)
    bt = max(1, min(max_bt, vmem_budget // bytes_per_bt))
    if N >= 2:
        bt = min(bt, max(1, N // 2))
    return int(max(1, bt))


def erb_forward(x_nchw, params):
    """params = [we1, be1, wf1, bf1, wr1, br1, we2, be2, wf2, bf2, wr2, br2]
    in the PyTorch layout used by make_params()."""
    N, C, H, W = x_nchw.shape
    HW = H * W
    RC = params[0].shape[1]

    Bt = _pick_batch_tile(N, C, RC, HW)
    n_steps = -(-N // Bt)                    # ceil: pad N instead of Bt=1 fallback
    N_pad = n_steps * Bt
    L = Bt * HW

    x2 = x_nchw.reshape(N, C, HW).astype(jnp.float32)   # free reshape, no transpose
    if N_pad != N:
        x2 = jnp.pad(x2, ((0, N_pad - N), (0, 0), (0, 0)))

    masks = _make_tap_masks(H, W, Bt)                    # (8, L), hoisted out of kernel
    kparams = _prepare_kernel_params(params, masks)
    kernel = _make_erb_kernel(H, W, Bt, RC)

    const_specs = [pl.BlockSpec(p.shape, lambda n: (0, 0))
                   for p in [masks] + kparams]           # all 2-D, resident
    out = pl.pallas_call(
        kernel,
        out_shape=jax.ShapeDtypeStruct((N_pad, C, HW), jnp.float32),
        grid_spec=pltpu.PrefetchScalarGridSpec(
            num_scalar_prefetch=0,
            grid=(n_steps,),
            in_specs=[pl.BlockSpec((Bt, C, HW), lambda n: (n, 0, 0))]
                     + const_specs,
            out_specs=pl.BlockSpec((Bt, C, HW), lambda n: (n, 0, 0)),
            scratch_shapes=[pltpu.VMEM((9 * RC, L), jnp.float32)]),
        compiler_params=pltpu.CompilerParams(
            dimension_semantics=("parallel",),           # batch steps independent
            vmem_limit_bytes=32 << 20),
    )(x2, masks, *kparams)
    if N_pad != N:
        out = out[:N]
    return out.reshape(N, C, H, W)


# ------------------------ pure-JAX reference (NCHW, like PyTorch) ------------

def _pad_tensor_ref(t, pattern):
    p = pattern.reshape(1, -1, 1, 1)
    t = jnp.pad(t, ((0, 0), (0, 0), (1, 1), (1, 1)))
    t = t.at[:, :, 0:1, :].set(p)
    t = t.at[:, :, -1:, :].set(p)
    t = t.at[:, :, :, 0:1].set(p)
    t = t.at[:, :, :, -1:].set(p)
    return t


def _rrrb_ref(x, we, be, wf, bf, wr, br):
    RC = we.shape[1]
    dn = ('NCHW', 'OIHW', 'NCHW')
    w_e = we.T[:, :, None, None]
    w_f = jnp.transpose(wf.reshape(3, 3, RC, RC), (3, 2, 0, 1))
    w_r = wr.T[:, :, None, None]
    out = lax.conv_general_dilated(x, w_e, (1, 1), 'VALID',
                                   dimension_numbers=dn) + be.reshape(1, -1, 1, 1)
    out_id = out
    padded = _pad_tensor_ref(out, be.reshape(-1))
    out = lax.conv_general_dilated(padded, w_f, (1, 1), 'VALID',
                                   dimension_numbers=dn) + bf.reshape(1, -1, 1, 1)
    out = out + out_id
    out = lax.conv_general_dilated(out, w_r, (1, 1), 'VALID',
                                   dimension_numbers=dn) + br.reshape(1, -1, 1, 1)
    return out + x


def erb_ref(x, params):
    we1, be1, wf1, bf1, wr1, br1, we2, be2, wf2, bf2, wr2, br2 = params
    o = _rrrb_ref(x, we1, be1, wf1, bf1, wr1, br1)
    o = jnp.where(o >= 0, o, LRELU * o)
    return _rrrb_ref(o, we2, be2, wf2, bf2, wr2, br2)


# -----------------------------------------------------------------------------

def make_params(key, n_feats, ratio):
    C, RC = n_feats, ratio * n_feats
    ks = jax.random.split(key, 12)
    def nrm(k, shape):
        return (0.1 * jax.random.normal(k, shape)).astype(jnp.float32)
    params = []
    for i in range(2):  # two RRRB blocks
        j = 6 * i
        params += [
            nrm(ks[j + 0], (C, RC)),        # expand_conv weight (in, out)
            nrm(ks[j + 1], (1, RC)),        # expand_conv bias
            nrm(ks[j + 2], (9, RC, RC)),    # fea_conv 3x3 weight per tap (in, out)
            nrm(ks[j + 3], (1, RC)),        # fea_conv bias
            nrm(ks[j + 4], (RC, C)),        # reduce_conv weight (in, out)
            nrm(ks[j + 5], (1, C)),         # reduce_conv bias
        ]
    return params


if __name__ == "__main__":
    N, C, H, W = 2, 4, 16, 16
    ratio = 2
    key = jax.random.PRNGKey(0)
    kx, kp = jax.random.split(key)
    x = jax.random.normal(kx, (N, C, H, W), dtype=jnp.float32)
    params = make_params(kp, C, ratio)

    out = erb_forward(x, params)
    out = jax.block_until_ready(out)

    ref = erb_ref(x, params)
    assert out.shape == (N, C, H, W)
    assert jnp.allclose(out, ref, rtol=1e-4, atol=1e-4), (
        float(jnp.max(jnp.abs(out - ref))))
    print("KERNEL_OK")
</pallas_src>

<mosaic_0001>
module attributes {stable_mosaic.version = 11 : i64} {
  func.func @kernel(%arg0: i32, %arg1: memref<1x4x256xf32, #tpu.memory_space<vmem>>, %arg2: memref<8x256xf32, #tpu.memory_space<vmem>>, %arg3: memref<8x4xf32, #tpu.memory_space<vmem>>, %arg4: memref<8x1xf32, #tpu.memory_space<vmem>>, %arg5: memref<8x72xf32, #tpu.memory_space<vmem>>, %arg6: memref<8x256xf32, #tpu.memory_space<vmem>>, %arg7: memref<4x8xf32, #tpu.memory_space<vmem>>, %arg8: memref<4x1xf32, #tpu.memory_space<vmem>>, %arg9: memref<8x4xf32, #tpu.memory_space<vmem>>, %arg10: memref<8x1xf32, #tpu.memory_space<vmem>>, %arg11: memref<8x72xf32, #tpu.memory_space<vmem>>, %arg12: memref<8x256xf32, #tpu.memory_space<vmem>>, %arg13: memref<4x8xf32, #tpu.memory_space<vmem>>, %arg14: memref<4x1xf32, #tpu.memory_space<vmem>>, %arg15: memref<1x4x256xf32, #tpu.memory_space<vmem>>, %arg16: memref<72x256xf32, #tpu.memory_space<vmem>>) attributes {dimension_semantics = [#tpu.dimension_semantics<parallel>], iteration_bounds = array<i64: 2>, scalar_prefetch = 0 : i64, scratch_operands = 1 : i64, tpu.core_type = #tpu.core_type<tc>, window_params = [{transform_indices = @transform_0, window_bounds = array<i64: 1, 4, 256>}, {pipeline_mode = #tpu.pipeline_mode<synchronous>, transform_indices = @transform_1, window_bounds = array<i64: 8, 256>}, {pipeline_mode = #tpu.pipeline_mode<synchronous>, transform_indices = @transform_2, window_bounds = array<i64: 8, 4>}, {pipeline_mode = #tpu.pipeline_mode<synchronous>, transform_indices = @transform_3, window_bounds = array<i64: 8, 1>}, {pipeline_mode = #tpu.pipeline_mode<synchronous>, transform_indices = @transform_4, window_bounds = array<i64: 8, 72>}, {pipeline_mode = #tpu.pipeline_mode<synchronous>, transform_indices = @transform_5, window_bounds = array<i64: 8, 256>}, {pipeline_mode = #tpu.pipeline_mode<synchronous>, transform_indices = @transform_6, window_bounds = array<i64: 4, 8>}, {pipeline_mode = #tpu.pipeline_mode<synchronous>, transform_indices = @transform_7, window_bounds = array<i64: 4, 1>}, {pipeline_mode = #tpu.pipeline_mode<synchronous>, transform_indices = @transform_8, window_bounds = array<i64: 8, 4>}, {pipeline_mode = #tpu.pipeline_mode<synchronous>, transform_indices = @transform_9, window_bounds = array<i64: 8, 1>}, {pipeline_mode = #tpu.pipeline_mode<synchronous>, transform_indices = @transform_10, window_bounds = array<i64: 8, 72>}, {pipeline_mode = #tpu.pipeline_mode<synchronous>, transform_indices = @transform_11, window_bounds = array<i64: 8, 256>}, {pipeline_mode = #tpu.pipeline_mode<synchronous>, transform_indices = @transform_12, window_bounds = array<i64: 4, 8>}, {pipeline_mode = #tpu.pipeline_mode<synchronous>, transform_indices = @transform_13, window_bounds = array<i64: 4, 1>}, {transform_indices = @transform_14, window_bounds = array<i64: 1, 4, 256>}]} {
    %c0 = arith.constant 0 : index
    %c0_0 = arith.constant 0 : index
    %c0_1 = arith.constant 0 : index
    %0 = vector.load %arg1[%c0, %c0_0, %c0_1] : memref<1x4x256xf32, #tpu.memory_space<vmem>>, vector<1x4x256xf32>
    %1 = vector.shape_cast %0 : vector<1x4x256xf32> to vector<4x256xf32>
    %c0_2 = arith.constant 0 : index
    %c0_3 = arith.constant 0 : index
    %2 = vector.load %arg3[%c0_2, %c0_3] : memref<8x4xf32, #tpu.memory_space<vmem>>, vector<8x4xf32>
    %cst = arith.constant dense<0.000000e+00> : vector<8x256xf32>
    %3 = tpu.matmul %2, %1, %cst {dimension_numbers = #tpu.dot_dimension_numbers<[1], [0], [0], [1], [0, 0, 1, 1], [], []>} : vector<8x4xf32>, vector<4x256xf32>, vector<8x256xf32> -> vector<8x256xf32>
    %c0_4 = arith.constant 0 : index
    %c0_5 = arith.constant 0 : index
    %4 = vector.load %arg4[%c0_4, %c0_5] : memref<8x1xf32, #tpu.memory_space<vmem>>, vector<8x1xf32>
    %5 = vector.broadcast %4 : vector<8x1xf32> to vector<8x256xf32>
    %6 = arith.addf %3, %5 : vector<8x256xf32>
    %c0_6 = arith.constant 0 : index
    %c0_7 = arith.constant 0 : index
    %7 = vector.load %arg2[%c0_6, %c0_7] : memref<8x256xf32, #tpu.memory_space<vmem>>, vector<1x256xf32>
    %c17_i32 = arith.constant 17 : i32
    %8 = tpu.dynamic_rotate %6 by %c17_i32 dim 1 : vector<8x256xf32>, i32 -> vector<8x256xf32>
    %9 = vector.broadcast %7 : vector<1x256xf32> to vector<8x256xf32>
    %10 = arith.mulf %8, %9 : vector<8x256xf32>
    %c0_8 = arith.constant 0 : index
    %c0_9 = arith.constant 0 : index
    %11 = vector.load %arg16[%c0_8, %c0_9] : memref<72x256xf32, #tpu.memory_space<vmem>>, vector<8x256xf32>
    tpu.vector_store %arg16[%c0_8, %c0_9], %10 {strides = array<i32>} : memref<72x256xf32, #tpu.memory_space<vmem>>, vector<8x256xf32>,
    %c1 = arith.constant 1 : index
    %c0_10 = arith.constant 0 : index
    %12 = vector.load %arg2[%c1, %c0_10] : memref<8x256xf32, #tpu.memory_space<vmem>>, vector<1x256xf32>
    %c16_i32 = arith.constant 16 : i32
    %13 = tpu.dynamic_rotate %6 by %c16_i32 dim 1 : vector<8x256xf32>, i32 -> vector<8x256xf32>
    %14 = vector.broadcast %12 : vector<1x256xf32> to vector<8x256xf32>
    %15 = arith.mulf %13, %14 : vector<8x256xf32>
    %c8 = arith.constant 8 : index
    %c0_11 = arith.constant 0 : index
    %16 = vector.load %arg16[%c8, %c0_11] : memref<72x256xf32, #tpu.memory_space<vmem>>, vector<8x256xf32>
    tpu.vector_store %arg16[%c8, %c0_11], %15 {strides = array<i32>} : memref<72x256xf32, #tpu.memory_space<vmem>>, vector<8x256xf32>,
    %c2 = arith.constant 2 : index
    %c0_12 = arith.constant 0 : index
    %17 = vector.load %arg2[%c2, %c0_12] : memref<8x256xf32, #tpu.memory_space<vmem>>, vector<1x256xf32>
    %c15_i32 = arith.constant 15 : i32
    %18 = tpu.dynamic_rotate %6 by %c15_i32 dim 1 : vector<8x256xf32>, i32 -> vector<8x256xf32>
    %19 = vector.broadcast %17 : vector<1x256xf32> to vector<8x256xf32>
    %20 = arith.mulf %18, %19 : vector<8x256xf32>
    %c16 = arith.constant 16 : index
    %c0_13 = arith.constant 0 : index
    %21 = vector.load %arg16[%c16, %c0_13] : memref<72x256xf32, #tpu.memory_space<vmem>>, vector<8x256xf32>
    tpu.vector_store %arg16[%c16, %c0_13], %20 {strides = array<i32>} : memref<72x256xf32, #tpu.memory_space<vmem>>, vector<8x256xf32>,
    %c3 = arith.constant 3 : index
    %c0_14 = arith.constant 0 : index
    %22 = vector.load %arg2[%c3, %c0_14] : memref<8x256xf32, #tpu.memory_space<vmem>>, vector<1x256xf32>
    %c1_i32 = arith.constant 1 : i32
    %23 = tpu.dynamic_rotate %6 by %c1_i32 dim 1 : vector<8x256xf32>, i32 -> vector<8x256xf32>
    %24 = vector.broadcast %22 : vector<1x256xf32> to vector<8x256xf32>
    %25 = arith.mulf %23, %24 : vector<8x256xf32>
    %c24 = arith.constant 24 : index
    %c0_15 = arith.constant 0 : index
    %26 = vector.load %arg16[%c24, %c0_15] : memref<72x256xf32, #tpu.memory_space<vmem>>, vector<8x256xf32>
    tpu.vector_store %arg16[%c24, %c0_15], %25 {strides = array<i32>} : memref<72x256xf32, #tpu.memory_space<vmem>>, vector<8x256xf32>,
    %c32 = arith.constant 32 : index
    %c0_16 = arith.constant 0 : index
    %27 = vector.load %arg16[%c32, %c0_16] : memref<72x256xf32, #tpu.memory_space<vmem>>, vector<8x256xf32>
    tpu.vector_store %arg16[%c32, %c0_16], %6 {strides = array<i32>} : memref<72x256xf32, #tpu.memory_space<vmem>>, vector<8x256xf32>,
    %c4 = arith.constant 4 : index
    %c0_17 = arith.constant 0 : index
    %28 = vector.load %arg2[%c4, %c0_17] : memref<8x256xf32, #tpu.memory_space<vmem>>, vector<1x256xf32>
    %c255_i32 = arith.constant 255 : i32
    %29 = tpu.dynamic_rotate %6 by %c255_i32 dim 1 : vector<8x256xf32>, i32 -> vector<8x256xf32>
    %30 = vector.broadcast %28 : vector<1x256xf32> to vector<8x256xf32>
    %31 = arith.mulf %29, %30 : vector<8x256xf32>
    %c40 = arith.constant 40 : index
    %c0_18 = arith.constant 0 : index
    %32 = vector.load %arg16[%c40, %c0_18] : memref<72x256xf32, #tpu.memory_space<vmem>>, vector<8x256xf32>
    tpu.vector_store %arg16[%c40, %c0_18], %31 {strides = array<i32>} : memref<72x256xf32, #tpu.memory_space<vmem>>, vector<8x256xf32>,
    %c5 = arith.constant 5 : index
    %c0_19 = arith.constant 0 : index
    %33 = vector.load %arg2[%c5, %c0_19] : memref<8x256xf32, #tpu.memory_space<vmem>>, vector<1x256xf32>
    %c241_i32 = arith.constant 241 : i32
    %34 = tpu.dynamic_rotate %6 by %c241_i32 dim 1 : vector<8x256xf32>, i32 -> vector<8x256xf32>
    %35 = vector.broadcast %33 : vector<1x256xf32> to vector<8x256xf32>
    %36 = arith.mulf %34, %35 : vector<8x256xf32>
    %c48 = arith.constant 48 : index
    %c0_20 = arith.constant 0 : index
    %37 = vector.load %arg16[%c48, %c0_20] : memref<72x256xf32, #tpu.memory_space<vmem>>, vector<8x256xf32>
    tpu.vector_store %arg16[%c48, %c0_20], %36 {strides = array<i32>} : memref<72x256xf32, #tpu.memory_space<vmem>>, vector<8x256xf32>,
    %c6 = arith.constant 6 : index
    %c0_21 = arith.constant 0 : index
    %38 = vector.load %arg2[%c6, %c0_21] : memref<8x256xf32, #tpu.memory_space<vmem>>, vector<1x256xf32>
    %c240_i32 = arith.constant 240 : i32
    %39 = tpu.dynamic_rotate %6 by %c240_i32 dim 1 : vector<8x256xf32>, i32 -> vector<8x256xf32>
    %40 = vector.broadcast %38 : vector<1x256xf32> to vector<8x256xf32>
    %41 = arith.mulf %39, %40 : vector<8x256xf32>
    %c56 = arith.constant 56 : index
    %c0_22 = arith.constant 0 : index
    %42 = vector.load %arg16[%c56, %c0_22] : memref<72x256xf32, #tpu.memory_space<vmem>>, vector<8x256xf32>
    tpu.vector_store %arg16[%c56, %c0_22], %41 {strides = array<i32>} : memref<72x256xf32, #tpu.memory_space<vmem>>, vector<8x256xf32>,
    %c7 = arith.constant 7 : index
    %c0_23 = arith.constant 0 : index
    %43 = vector.load %arg2[%c7, %c0_23] : memref<8x256xf32, #tpu.memory_space<vmem>>, vector<1x256xf32>
    %c239_i32 = arith.constant 239 : i32
    %44 = tpu.dynamic_rotate %6 by %c239_i32 dim 1 : vector<8x256xf32>, i32 -> vector<8x256xf32>
    %45 = vector.broadcast %43 : vector<1x256xf32> to vector<8x256xf32>
    %46 = arith.mulf %44, %45 : vector<8x256xf32>
    %c64 = arith.constant 64 : index
    %c0_24 = arith.constant 0 : index
    %47 = vector.load %arg16[%c64, %c0_24] : memref<72x256xf32, #tpu.memory_space<vmem>>, vector<8x256xf32>
    tpu.vector_store %arg16[%c64, %c0_24], %46 {strides = array<i32>} : memref<72x256xf32, #tpu.memory_space<vmem>>, vector<8x256xf32>,
    %c0_25 = arith.constant 0 : index
    %c0_26 = arith.constant 0 : index
    %48 = vector.load %arg5[%c0_25, %c0_26] : memref<8x72xf32, #tpu.memory_space<vmem>>, vector<8x72xf32>
    %c0_27 = arith.constant 0 : index
    %c0_28 = arith.constant 0 : index
    %49 = vector.load %arg16[%c0_27, %c0_28] : memref<72x256xf32, #tpu.memory_space<vmem>>, vector<72x256xf32>
    %cst_29 = arith.constant dense<0.000000e+00> : vector<8x256xf32>
    %50 = tpu.matmul %48, %49, %cst_29 {dimension_numbers = #tpu.dot_dimension_numbers<[1], [0], [0], [1], [0, 0, 1, 1], [], []>} : vector<8x72xf32>, vector<72x256xf32>, vector<8x256xf32> -> vector<8x256xf32>
    %c0_30 = arith.constant 0 : index
    %c0_31 = arith.constant 0 : index
    %51 = vector.load %arg6[%c0_30, %c0_31] : memref<8x256xf32, #tpu.memory_space<vmem>>, vector<8x256xf32>
    %52 = arith.addf %50, %51 : vector<8x256xf32>
    %c0_32 = arith.constant 0 : index
    %c0_33 = arith.constant 0 : index
    %53 = vector.load %arg7[%c0_32, %c0_33] : memref<4x8xf32, #tpu.memory_space<vmem>>, vector<4x8xf32>
    %cst_34 = arith.constant dense<0.000000e+00> : vector<4x256xf32>
    %54 = tpu.matmul %53, %52, %cst_34 {dimension_numbers = #tpu.dot_dimension_numbers<[1], [0], [0], [1], [0, 0, 1, 1], [], []>} : vector<4x8xf32>, vector<8x256xf32>, vector<4x256xf32> -> vector<4x256xf32>
    %c0_35 = arith.constant 0 : index
    %c0_36 = arith.constant 0 : index
    %55 = vector.load %arg8[%c0_35, %c0_36] : memref<4x1xf32, #tpu.memory_space<vmem>>, vector<4x1xf32>
    %56 = vector.broadcast %55 : vector<4x1xf32> to vector<4x256xf32>
    %57 = arith.addf %54, %56 : vector<4x256xf32>
    %58 = arith.addf %57, %1 : vector<4x256xf32>
    %cst_37 = arith.constant 0.000000e+00 : f32
    %59 = vector.broadcast %cst_37 : f32 to vector<4x256xf32>
    %60 = arith.cmpf oge, %58, %59 : vector<4x256xf32>
    %cst_38 = arith.constant 1.000000e-01 : f32
    %61 = vector.broadcast %cst_38 : f32 to vector<4x256xf32>
    %62 = arith.mulf %61, %58 : vector<4x256xf32>
    %63 = arith.select %60, %58, %62 : vector<4x256xi1>, vector<4x256xf32>
    %c0_39 = arith.constant 0 : index
    %c0_40 = arith.constant 0 : index
    %64 = vector.load %arg9[%c0_39, %c0_40] : memref<8x4xf32, #tpu.memory_space<vmem>>, vector<8x4xf32>
    %cst_41 = arith.constant dense<0.000000e+00> : vector<8x256xf32>
    %65 = tpu.matmul %64, %63, %cst_41 {dimension_numbers = #tpu.dot_dimension_numbers<[1], [0], [0], [1], [0, 0, 1, 1], [], []>} : vector<8x4xf32>, vector<4x256xf32>, vector<8x256xf32> -> vector<8x256xf32>
    %c0_42 = arith.constant 0 : index
    %c0_43 = arith.constant 0 : index
    %66 = vector.load %arg10[%c0_42, %c0_43] : memref<8x1xf32, #tpu.memory_space<vmem>>, vector<8x1xf32>
    %67 = vector.broadcast %66 : vector<8x1xf32> to vector<8x256xf32>
    %68 = arith.addf %65, %67 : vector<8x256xf32>
    %c0_44 = arith.constant 0 : index
    %c0_45 = arith.constant 0 : index
    %69 = vector.load %arg2[%c0_44, %c0_45] : memref<8x256xf32, #tpu.memory_space<vmem>>, vector<1x256xf32>
    %c17_i32_46 = arith.constant 17 : i32
    %70 = tpu.dynamic_rotate %68 by %c17_i32_46 dim 1 : vector<8x256xf32>, i32 -> vector<8x256xf32>
    %71 = vector.broadcast %69 : vector<1x256xf32> to vector<8x256xf32>
    %72 = arith.mulf %70, %71 : vector<8x256xf32>
    %c0_47 = arith.constant 0 : index
    %c0_48 = arith.constant 0 : index
    %73 = vector.load %arg16[%c0_47, %c0_48] : memref<72x256xf32, #tpu.memory_space<vmem>>, vector<8x256xf32>
    tpu.vector_store %arg16[%c0_47, %c0_48], %72 {strides = array<i32>} : memref<72x256xf32, #tpu.memory_space<vmem>>, vector<8x256xf32>,
    %c1_49 = arith.constant 1 : index
    %c0_50 = arith.constant 0 : index
    %74 = vector.load %arg2[%c1_49, %c0_50] : memref<8x256xf32, #tpu.memory_space<vmem>>, vector<1x256xf32>
    %c16_i32_51 = arith.constant 16 : i32
    %75 = tpu.dynamic_rotate %68 by %c16_i32_51 dim 1 : vector<8x256xf32>, i32 -> vector<8x256xf32>
    %76 = vector.broadcast %74 : vector<1x256xf32> to vector<8x256xf32>
    %77 = arith.mulf %75, %76 : vector<8x256xf32>
    %c8_52 = arith.constant 8 : index
    %c0_53 = arith.constant 0 : index
    %78 = vector.load %arg16[%c8_52, %c0_53] : memref<72x256xf32, #tpu.memory_space<vmem>>, vector<8x256xf32>
    tpu.vector_store %arg16[%c8_52, %c0_53], %77 {strides = array<i32>} : memref<72x256xf32, #tpu.memory_space<vmem>>, vector<8x256xf32>,
    %c2_54 = arith.constant 2 : index
    %c0_55 = arith.constant 0 : index
    %79 = vector.load %arg2[%c2_54, %c0_55] : memref<8x256xf32, #tpu.memory_space<vmem>>, vector<1x256xf32>
    %c15_i32_56 = arith.constant 15 : i32
    %80 = tpu.dynamic_rotate %68 by %c15_i32_56 dim 1 : vector<8x256xf32>, i32 -> vector<8x256xf32>
    %81 = vector.broadcast %79 : vector<1x256xf32> to vector<8x256xf32>
    %82 = arith.mulf %80, %81 : vector<8x256xf32>
    %c16_57 = arith.constant 16 : index
    %c0_58 = arith.constant 0 : index
    %83 = vector.load %arg16[%c16_57, %c0_58] : memref<72x256xf32, #tpu.memory_space<vmem>>, vector<8x256xf32>
    tpu.vector_store %arg16[%c16_57, %c0_58], %82 {strides = array<i32>} : memref<72x256xf32, #tpu.memory_space<vmem>>, vector<8x256xf32>,
    %c3_59 = arith.constant 3 : index
    %c0_60 = arith.constant 0 : index
    %84 = vector.load %arg2[%c3_59, %c0_60] : memref<8x256xf32, #tpu.memory_space<vmem>>, vector<1x256xf32>
    %c1_i32_61 = arith.constant 1 : i32
    %85 = tpu.dynamic_rotate %68 by %c1_i32_61 dim 1 : vector<8x256xf32>, i32 -> vector<8x256xf32>
    %86 = vector.broadcast %84 : vector<1x256xf32> to vector<8x256xf32>
    %87 = arith.mulf %85, %86 : vector<8x256xf32>
    %c24_62 = arith.constant 24 : index
    %c0_63 = arith.constant 0 : index
    %88 = vector.load %arg16[%c24_62, %c0_63] : memref<72x256xf32, #tpu.memory_space<vmem>>, vector<8x256xf32>
    tpu.vector_store %arg16[%c24_62, %c0_63], %87 {strides = array<i32>} : memref<72x256xf32, #tpu.memory_space<vmem>>, vector<8x256xf32>,
    %c32_64 = arith.constant 32 : index
    %c0_65 = arith.constant 0 : index
    %89 = vector.load %arg16[%c32_64, %c0_65] : memref<72x256xf32, #tpu.memory_space<vmem>>, vector<8x256xf32>
    tpu.vector_store %arg16[%c32_64, %c0_65], %68 {strides = array<i32>} : memref<72x256xf32, #tpu.memory_space<vmem>>, vector<8x256xf32>,
    %c4_66 = arith.constant 4 : index
    %c0_67 = arith.constant 0 : index
    %90 = vector.load %arg2[%c4_66, %c0_67] : memref<8x256xf32, #tpu.memory_space<vmem>>, vector<1x256xf32>
    %c255_i32_68 = arith.constant 255 : i32
    %91 = tpu.dynamic_rotate %68 by %c255_i32_68 dim 1 : vector<8x256xf32>, i32 -> vector<8x256xf32>
    %92 = vector.broadcast %90 : vector<1x256xf32> to vector<8x256xf32>
    %93 = arith.mulf %91, %92 : vector<8x256xf32>
    %c40_69 = arith.constant 40 : index
    %c0_70 = arith.constant 0 : index
    %94 = vector.load %arg16[%c40_69, %c0_70] : memref<72x256xf32, #tpu.memory_space<vmem>>, vector<8x256xf32>
    tpu.vector_store %arg16[%c40_69, %c0_70], %93 {strides = array<i32>} : memref<72x256xf32, #tpu.memory_space<vmem>>, vector<8x256xf32>,
    %c5_71 = arith.constant 5 : index
    %c0_72 = arith.constant 0 : index
    %95 = vector.load %arg2[%c5_71, %c0_72] : memref<8x256xf32, #tpu.memory_space<vmem>>, vector<1x256xf32>
    %c241_i32_73 = arith.constant 241 : i32
    %96 = tpu.dynamic_rotate %68 by %c241_i32_73 dim 1 : vector<8x256xf32>, i32 -> vector<8x256xf32>
    %97 = vector.broadcast %95 : vector<1x256xf32> to vector<8x256xf32>
    %98 = arith.mulf %96, %97 : vector<8x256xf32>
    %c48_74 = arith.constant 48 : index
    %c0_75 = arith.constant 0 : index
    %99 = vector.load %arg16[%c48_74, %c0_75] : memref<72x256xf32, #tpu.memory_space<vmem>>, vector<8x256xf32>
    tpu.vector_store %arg16[%c48_74, %c0_75], %98 {strides = array<i32>} : memref<72x256xf32, #tpu.memory_space<vmem>>, vector<8x256xf32>,
    %c6_76 = arith.constant 6 : index
    %c0_77 = arith.constant 0 : index
    %100 = vector.load %arg2[%c6_76, %c0_77] : memref<8x256xf32, #tpu.memory_space<vmem>>, vector<1x256xf32>
    %c240_i32_78 = arith.constant 240 : i32
    %101 = tpu.dynamic_rotate %68 by %c240_i32_78 dim 1 : vector<8x256xf32>, i32 -> vector<8x256xf32>
    %102 = vector.broadcast %100 : vector<1x256xf32> to vector<8x256xf32>
    %103 = arith.mulf %101, %102 : vector<8x256xf32>
    %c56_79 = arith.constant 56 : index
    %c0_80 = arith.constant 0 : index
    %104 = vector.load %arg16[%c56_79, %c0_80] : memref<72x256xf32, #tpu.memory_space<vmem>>, vector<8x256xf32>
    tpu.vector_store %arg16[%c56_79, %c0_80], %103 {strides = array<i32>} : memref<72x256xf32, #tpu.memory_space<vmem>>, vector<8x256xf32>,
    %c7_81 = arith.constant 7 : index
    %c0_82 = arith.constant 0 : index
    %105 = vector.load %arg2[%c7_81, %c0_82] : memref<8x256xf32, #tpu.memory_space<vmem>>, vector<1x256xf32>
    %c239_i32_83 = arith.constant 239 : i32
    %106 = tpu.dynamic_rotate %68 by %c239_i32_83 dim 1 : vector<8x256xf32>, i32 -> vector<8x256xf32>
    %107 = vector.broadcast %105 : vector<1x256xf32> to vector<8x256xf32>
    %108 = arith.mulf %106, %107 : vector<8x256xf32>
    %c64_84 = arith.constant 64 : index
    %c0_85 = arith.constant 0 : index
    %109 = vector.load %arg16[%c64_84, %c0_85] : memref<72x256xf32, #tpu.memory_space<vmem>>, vector<8x256xf32>
    tpu.vector_store %arg16[%c64_84, %c0_85], %108 {strides = array<i32>} : memref<72x256xf32, #tpu.memory_space<vmem>>, vector<8x256xf32>,
    %c0_86 = arith.constant 0 : index
    %c0_87 = arith.constant 0 : index
    %110 = vector.load %arg11[%c0_86, %c0_87] : memref<8x72xf32, #tpu.memory_space<vmem>>, vector<8x72xf32>
    %c0_88 = arith.constant 0 : index
    %c0_89 = arith.constant 0 : index
    %111 = vector.load %arg16[%c0_88, %c0_89] : memref<72x256xf32, #tpu.memory_space<vmem>>, vector<72x256xf32>
    %cst_90 = arith.constant dense<0.000000e+00> : vector<8x256xf32>
    %112 = tpu.matmul %110, %111, %cst_90 {dimension_numbers = #tpu.dot_dimension_numbers<[1], [0], [0], [1], [0, 0, 1, 1], [], []>} : vector<8x72xf32>, vector<72x256xf32>, vector<8x256xf32> -> vector<8x256xf32>
    %c0_91 = arith.constant 0 : index
    %c0_92 = arith.constant 0 : index
    %113 = vector.load %arg12[%c0_91, %c0_92] : memref<8x256xf32, #tpu.memory_space<vmem>>, vector<8x256xf32>
    %114 = arith.addf %112, %113 : vector<8x256xf32>
    %c0_93 = arith.constant 0 : index
    %c0_94 = arith.constant 0 : index
    %115 = vector.load %arg13[%c0_93, %c0_94] : memref<4x8xf32, #tpu.memory_space<vmem>>, vector<4x8xf32>
    %cst_95 = arith.constant dense<0.000000e+00> : vector<4x256xf32>
    %116 = tpu.matmul %115, %114, %cst_95 {dimension_numbers = #tpu.dot_dimension_numbers<[1], [0], [0], [1], [0, 0, 1, 1], [], []>} : vector<4x8xf32>, vector<8x256xf32>, vector<4x256xf32> -> vector<4x256xf32>
    %c0_96 = arith.constant 0 : index
    %c0_97 = arith.constant 0 : index
    %117 = vector.load %arg14[%c0_96, %c0_97] : memref<4x1xf32, #tpu.memory_space<vmem>>, vector<4x1xf32>
    %118 = vector.broadcast %117 : vector<4x1xf32> to vector<4x256xf32>
    %119 = arith.addf %116, %118 : vector<4x256xf32>
    %120 = arith.addf %119, %63 : vector<4x256xf32>
    %c0_98 = arith.constant 0 : index
    %c0_99 = arith.constant 0 : index
    %c0_100 = arith.constant 0 : index
    %121 = vector.load %arg15[%c0_98, %c0_99, %c0_100] : memref<1x4x256xf32, #tpu.memory_space<vmem>>, vector<1x4x256xf32>
    %122 = vector.shape_cast %121 : vector<1x4x256xf32> to vector<4x256xf32>
    %123 = vector.shape_cast %120 : vector<4x256xf32> to vector<1x4x256xf32>
    tpu.vector_store %arg15[%c0_98, %c0_99, %c0_100], %123 {strides = array<i32>} : memref<1x4x256xf32, #tpu.memory_space<vmem>>, vector<1x4x256xf32>,
    return
  }
  func.func @transform_0(%arg0: i32) -> (i32, i32, i32) {
    %c0_i32 = arith.constant 0 : i32
    %c0_i32_0 = arith.constant 0 : i32
    %c0_i32_1 = arith.constant 0 : i32
    return %arg0, %c0_i32, %c0_i32_0 : i32, i32, i32
  }
  func.func @transform_1(%arg0: i32) -> (i32, i32) {
    %c0_i32 = arith.constant 0 : i32
    %c0_i32_0 = arith.constant 0 : i32
    %c0_i32_1 = arith.constant 0 : i32
    return %c0_i32, %c0_i32_0 : i32, i32
  }
  func.func @transform_2(%arg0: i32) -> (i32, i32) {
    %c0_i32 = arith.constant 0 : i32
    %c0_i32_0 = arith.constant 0 : i32
    %c0_i32_1 = arith.constant 0 : i32
    return %c0_i32, %c0_i32_0 : i32, i32
  }
  func.func @transform_3(%arg0: i32) -> (i32, i32) {
    %c0_i32 = arith.constant 0 : i32
    %c0_i32_0 = arith.constant 0 : i32
    %c0_i32_1 = arith.constant 0 : i32
    return %c0_i32, %c0_i32_0 : i32, i32
  }
  func.func @transform_4(%arg0: i32) -> (i32, i32) {
    %c0_i32 = arith.constant 0 : i32
    %c0_i32_0 = arith.constant 0 : i32
    %c0_i32_1 = arith.constant 0 : i32
    return %c0_i32, %c0_i32_0 : i32, i32
  }
  func.func @transform_5(%arg0: i32) -> (i32, i32) {
    %c0_i32 = arith.constant 0 : i32
    %c0_i32_0 = arith.constant 0 : i32
    %c0_i32_1 = arith.constant 0 : i32
    return %c0_i32, %c0_i32_0 : i32, i32
  }
  func.func @transform_6(%arg0: i32) -> (i32, i32) {
    %c0_i32 = arith.constant 0 : i32
    %c0_i32_0 = arith.constant 0 : i32
    %c0_i32_1 = arith.constant 0 : i32
    return %c0_i32, %c0_i32_0 : i32, i32
  }
  func.func @transform_7(%arg0: i32) -> (i32, i32) {
    %c0_i32 = arith.constant 0 : i32
    %c0_i32_0 = arith.constant 0 : i32
    %c0_i32_1 = arith.constant 0 : i32
    return %c0_i32, %c0_i32_0 : i32, i32
  }
  func.func @transform_8(%arg0: i32) -> (i32, i32) {
    %c0_i32 = arith.constant 0 : i32
    %c0_i32_0 = arith.constant 0 : i32
    %c0_i32_1 = arith.constant 0 : i32
    return %c0_i32, %c0_i32_0 : i32, i32
  }
  func.func @transform_9(%arg0: i32) -> (i32, i32) {
    %c0_i32 = arith.constant 0 : i32
    %c0_i32_0 = arith.constant 0 : i32
    %c0_i32_1 = arith.constant 0 : i32
    return %c0_i32, %c0_i32_0 : i32, i32
  }
  func.func @transform_10(%arg0: i32) -> (i32, i32) {
    %c0_i32 = arith.constant 0 : i32
    %c0_i32_0 = arith.constant 0 : i32
    %c0_i32_1 = arith.constant 0 : i32
    return %c0_i32, %c0_i32_0 : i32, i32
  }
  func.func @transform_11(%arg0: i32) -> (i32, i32) {
    %c0_i32 = arith.constant 0 : i32
    %c0_i32_0 = arith.constant 0 : i32
    %c0_i32_1 = arith.constant 0 : i32
    return %c0_i32, %c0_i32_0 : i32, i32
  }
  func.func @transform_12(%arg0: i32) -> (i32, i32) {
    %c0_i32 = arith.constant 0 : i32
    %c0_i32_0 = arith.constant 0 : i32
    %c0_i32_1 = arith.constant 0 : i32
    return %c0_i32, %c0_i32_0 : i32, i32
  }
  func.func @transform_13(%arg0: i32) -> (i32, i32) {
    %c0_i32 = arith.constant 0 : i32
    %c0_i32_0 = arith.constant 0 : i32
    %c0_i32_1 = arith.constant 0 : i32
    return %c0_i32, %c0_i32_0 : i32, i32
  }
  func.func @transform_14(%arg0: i32) -> (i32, i32, i32) {
    %c0_i32 = arith.constant 0 : i32
    %c0_i32_0 = arith.constant 0 : i32
    %c0_i32_1 = arith.constant 0 : i32
    return %arg0, %c0_i32, %c0_i32_0 : i32, i32, i32
  }
}

</mosaic_0001>

<llo_original>
// kernel: tpu_custom_call.1
$region0: #{tpu_custom_call.1}
  #allocation0 [shape = 'u32[]', space=smem, size = 0x4, offset = 0x4, fixed_abs, tag = 'smem constant byte address 0x4 - core index']
  #allocation1 [shape = 'u32[72,128]{1,0:T(1,128)}', space=vmem, size = 0x9000, scoped, tag = 'internal scratch']
  #allocation2 [shape = 'f32[72,256]{1,0:T(8,128)}', space=vmem, size = 0x12000, scoped, tag = 'scratch operand']
  %s0 = inlined_call_operand.vmem [shape: f32[2,4,256], index: 0, kind: input, shape index: {}]
  %s1 = inlined_call_operand.hbm [shape: f32[8,256], index: 1, kind: input, shape index: {}]
  %s2 = inlined_call_operand.vmem [shape: f32[8,4], index: 2, kind: input, shape index: {}]
  %s3 = inlined_call_operand.vmem [shape: f32[8,1], index: 3, kind: input, shape index: {}]
  %s4 = inlined_call_operand.vmem [shape: f32[8,72], index: 4, kind: input, shape index: {}]
  %s5 = inlined_call_operand.hbm [shape: f32[8,256], index: 5, kind: input, shape index: {}]
  %s6 = inlined_call_operand.vmem [shape: f32[4,8], index: 6, kind: input, shape index: {}]
  %s7 = inlined_call_operand.vmem [shape: f32[4,1], index: 7, kind: input, shape index: {}]
  %s8 = inlined_call_operand.vmem [shape: f32[8,4], index: 8, kind: input, shape index: {}]
  %s9 = inlined_call_operand.vmem [shape: f32[8,1], index: 9, kind: input, shape index: {}]
  %s10 = inlined_call_operand.vmem [shape: f32[8,72], index: 10, kind: input, shape index: {}]
  %s11 = inlined_call_operand.hbm [shape: f32[8,256], index: 11, kind: input, shape index: {}]
  %s12 = inlined_call_operand.vmem [shape: f32[4,8], index: 12, kind: input, shape index: {}]
  %s13 = inlined_call_operand.vmem [shape: f32[4,1], index: 13, kind: input, shape index: {}]
  %s14 = inlined_call_operand.hbm [shape: f32[2,4,256], index: 14, kind: output, shape index: {}]
  %s15 = sld [smem:[#allocation0]]
  $region101: #{tpu_custom_call.1} parent=0
    _
  %s17 = ssub.s32 1, %s15
  %s18 = scalar_select 0, %s17, %s15
  $region1: #{tpu_custom_call.1} parent=0
    #allocation3 [shape = 'u8[8192]{0}', space=vmem, size = 0x2000, scoped, tag = 'input window, operand 1, single buffered']
    #allocation4 [shape = 's32[2]{0}', space=sflag, size = 0x8, scoped, tag = 'scoped memory for tpu_custom_call.1']
    #allocation5 [shape = 's32[2]{0}', space=sflag, size = 0x8, scoped, tag = 'scoped memory for tpu_custom_call.1']
    #allocation6 [shape = 'u8[8192]{0}', space=vmem, size = 0x2000, scoped, tag = 'input window, operand 5, single buffered']
    #allocation7 [shape = 's32[1]{0}', space=sflag, size = 0x4, scoped, tag = 'scoped memory for tpu_custom_call.1']
    #allocation8 [shape = 'u8[8192]{0}', space=vmem, size = 0x2000, scoped, tag = 'input window, operand 11, single buffered']
    #allocation9 [shape = 'u8[8192]{0}', space=vmem, size = 0x2000, scoped, tag = 'output window, operand 0']
    %19 = vsyncpa [#allocation4], 0
    %20 = vsyncpa [#allocation7], 0
    %21 = vsyncpa [#allocation5], 0
    %s22 = scalar_lea.sflag [#allocation5], 1
    %23 = vsyncpa %s22, 0
    loop: start=0, step=1, limit=4
    $region2: #{tpu_custom_call.1} parent=1 // loop_pre_header
      _
    $region3: #{tpu_custom_call.1} parent=1 // loop_header
      %s25 = sphi 0, %s29
      %p26 = scmp.ge.s32.totalorder %s25, 4
      %s35 = sphi 0, %s37
      %s38 = sphi 0, %s35
      %s39 = sphi 0, %s38
      %s55 = sphi 0, %s39
      %s59 = sphi 0, %s59
      %s61 = sphi 0, %s59
      %s62 = sphi 0, %s61
      %s76 = sphi 0, %s62
      %s80 = sphi 0, %s80
      %s82 = sphi 0, %s80
      %s83 = sphi 0, %s82
      %s97 = sphi 0, %s83
      %s101 = sphi 0, %s101
      %s103 = sphi 0, %s101
      %s104 = sphi 0, %s103
      %s118 = sphi 0, %s104
      %s122 = sphi 0, %s122
      %s124 = sphi 0, %s122
      %s125 = sphi 0, %s124
      %s139 = sphi 0, %s125
      %s143 = sphi 0, %s143
      %s145 = sphi 0, %s143
      %s146 = sphi 0, %s145
      %s160 = sphi 0, %s146
      %s164 = sphi 0, %s164
      %s166 = sphi 0, %s164
      %s167 = sphi 0, %s166
      %s181 = sphi 0, %s167
      %s185 = sphi 0, %s185
      %s187 = sphi 0, %s185
      %s188 = sphi 0, %s187
      %s202 = sphi 0, %s188
      %s206 = sphi 0, %s206
      %s208 = sphi 0, %s206
      %s209 = sphi 0, %s208
      %s223 = sphi 0, %s209
      %s227 = sphi 0, %s227
      %s229 = sphi 0, %s227
      %s230 = sphi 0, %s229
      %s244 = sphi 0, %s230
      %s248 = sphi 0, %s248
      %s250 = sphi 0, %s248
      %s251 = sphi 0, %s250
      %s265 = sphi 0, %s251
      %s269 = sphi 0, %s269
      %s271 = sphi 0, %s269
      %s272 = sphi 0, %s271
      %s286 = sphi 0, %s272
      %s290 = sphi 0, %s290
      %s292 = sphi 0, %s290
      %s293 = sphi 0, %s292
      %s307 = sphi 0, %s293
      %s311 = sphi 0, %s311
      %s313 = sphi 0, %s311
      %s314 = sphi 0, %s313
      %s328 = sphi 0, %s314
      %s334 = sphi 0, %s336
      %s337 = sphi 0, %s334
      %s338 = sphi 0, %s337
      %s354 = sphi 0, %s338
    $region4: #{tpu_custom_call.1} parent=1 // loop_header_branch
      %28 = sbr.rel (%p26) target = $region8
    $region5: #{tpu_custom_call.1} parent=1 // loop_body
      %s30 = ssub.s32 %s25, 1
      %s31 = ssub.s32 %s25, 2
      %s32 = sadd.s32 %s25, 1
      %s33 = ssub.s32 %s25, %s32
      %p34 = scmp.eq.s32.totalorder %s33, 0
      %s36 = sadd.s32 %s35, 1
      %s37 = scalar_select %p34, %s35, %s36
      %p40 = pneg %p34
      %p41 = scmp.eq.s32.totalorder %s25, 1
      %p42 = por %p40, %p41
      %p43 = scmp.ne.s32.totalorder %s35, %s38
      %p44 = scmp.eq.s32.totalorder %s25, 0
      %p45 = por %p43, %p44
      %p46 = scmp.ne.s32.totalorder %s35, %s38
      %p47 = scmp.eq.s32.totalorder %s30, 1
      %p48 = por %p46, %p47
      %p49 = scmp.ne.s32.totalorder %s38, %s39
      %p50 = scmp.eq.s32.totalorder %s30, 0
      %p51 = por %p49, %p50
      %p52 = scmp.ne.s32.totalorder %s38, %s39
      %p53 = scmp.eq.s32.totalorder %s31, 1
      %p54 = por %p52, %p53
      %p56 = scmp.ne.s32.totalorder %s39, %s55
      %p57 = scmp.eq.s32.totalorder %s31, 0
      %p58 = por %p56, %p57
      %s60 = sadd.s32 %s59, 1
      %p63 = scmp.eq.s32.totalorder %s25, 1
      %p64 = scmp.ne.s32.totalorder %s59, %s61
      %p65 = scmp.eq.s32.totalorder %s25, 0
      %p66 = por %p64, %p65
      %p67 = scmp.ne.s32.totalorder %s59, %s61
      %p68 = scmp.eq.s32.totalorder %s30, 1
      %p69 = por %p67, %p68
      %p70 = scmp.ne.s32.totalorder %s61, %s62
      %p71 = scmp.eq.s32.totalorder %s30, 0
      %p72 = por %p70, %p71
      %p73 = scmp.ne.s32.totalorder %s61, %s62
      %p74 = scmp.eq.s32.totalorder %s31, 1
      %p75 = por %p73, %p74
      %p77 = scmp.ne.s32.totalorder %s62, %s76
      %p78 = scmp.eq.s32.totalorder %s31, 0
      %p79 = por %p77, %p78
      %s81 = sadd.s32 %s80, 1
      %p84 = scmp.eq.s32.totalorder %s25, 1
      %p85 = scmp.ne.s32.totalorder %s80, %s82
      %p86 = scmp.eq.s32.totalorder %s25, 0
      %p87 = por %p85, %p86
      %p88 = scmp.ne.s32.totalorder %s80, %s82
      %p89 = scmp.eq.s32.totalorder %s30, 1
      %p90 = por %p88, %p89
      %p91 = scmp.ne.s32.totalorder %s82, %s83
      %p92 = scmp.eq.s32.totalorder %s30, 0
      %p93 = por %p91, %p92
      %p94 = scmp.ne.s32.totalorder %s82, %s83
      %p95 = scmp.eq.s32.totalorder %s31, 1
      %p96 = por %p94, %p95
      %p98 = scmp.ne.s32.totalorder %s83, %s97
      %p99 = scmp.eq.s32.totalorder %s31, 0
      %p100 = por %p98, %p99
      %s102 = sadd.s32 %s101, 1
      %p105 = scmp.eq.s32.totalorder %s25, 1
      %p106 = scmp.ne.s32.totalorder %s101, %s103
      %p107 = scmp.eq.s32.totalorder %s25, 0
      %p108 = por %p106, %p107
      %p109 = scmp.ne.s32.totalorder %s101, %s103
      %p110 = scmp.eq.s32.totalorder %s30, 1
      %p111 = por %p109, %p110
      %p112 = scmp.ne.s32.totalorder %s103, %s104
      %p113 = scmp.eq.s32.totalorder %s30, 0
      %p114 = por %p112, %p113
      %p115 = scmp.ne.s32.totalorder %s103, %s104
      %p116 = scmp.eq.s32.totalorder %s31, 1
      %p117 = por %p115, %p116
      %p119 = scmp.ne.s32.totalorder %s104, %s118
      %p120 = scmp.eq.s32.totalorder %s31, 0
      %p121 = por %p119, %p120
      %s123 = sadd.s32 %s122, 1
      %p126 = scmp.eq.s32.totalorder %s25, 1
      %p127 = scmp.ne.s32.totalorder %s122, %s124
      %p128 = scmp.eq.s32.totalorder %s25, 0
      %p129 = por %p127, %p128
      %p130 = scmp.ne.s32.totalorder %s122, %s124
      %p131 = scmp.eq.s32.totalorder %s30, 1
      %p132 = por %p130, %p131
      %p133 = scmp.ne.s32.totalorder %s124, %s125
      %p134 = scmp.eq.s32.totalorder %s30, 0
      %p135 = por %p133, %p134
      %p136 = scmp.ne.s32.totalorder %s124, %s125
      %p137 = scmp.eq.s32.totalorder %s31, 1
      %p138 = por %p136, %p137
      %p140 = scmp.ne.s32.totalorder %s125, %s139
      %p141 = scmp.eq.s32.totalorder %s31, 0
      %p142 = por %p140, %p141
      %s144 = sadd.s32 %s143, 1
      %p147 = scmp.eq.s32.totalorder %s25, 1
      %p148 = scmp.ne.s32.totalorder %s143, %s145
      %p149 = scmp.eq.s32.totalorder %s25, 0
      %p150 = por %p148, %p149
      %p151 = scmp.ne.s32.totalorder %s143, %s145
      %p152 = scmp.eq.s32.totalorder %s30, 1
      %p153 = por %p151, %p152
      %p154 = scmp.ne.s32.totalorder %s145, %s146
      %p155 = scmp.eq.s32.totalorder %s30, 0
      %p156 = por %p154, %p155
      %p157 = scmp.ne.s32.totalorder %s145, %s146
      %p158 = scmp.eq.s32.totalorder %s31, 1
      %p159 = por %p157, %p158
      %p161 = scmp.ne.s32.totalorder %s146, %s160
      %p162 = scmp.eq.s32.totalorder %s31, 0
      %p163 = por %p161, %p162
      %s165 = sadd.s32 %s164, 1
      %p168 = scmp.eq.s32.totalorder %s25, 1
      %p169 = scmp.ne.s32.totalorder %s164, %s166
      %p170 = scmp.eq.s32.totalorder %s25, 0
      %p171 = por %p169, %p170
      %p172 = scmp.ne.s32.totalorder %s164, %s166
      %p173 = scmp.eq.s32.totalorder %s30, 1
      %p174 = por %p172, %p173
      %p175 = scmp.ne.s32.totalorder %s166, %s167
      %p176 = scmp.eq.s32.totalorder %s30, 0
      %p177 = por %p175, %p176
      %p178 = scmp.ne.s32.totalorder %s166, %s167
      %p179 = scmp.eq.s32.totalorder %s31, 1
      %p180 = por %p178, %p179
      %p182 = scmp.ne.s32.totalorder %s167, %s181
      %p183 = scmp.eq.s32.totalorder %s31, 0
      %p184 = por %p182, %p183
      %s186 = sadd.s32 %s185, 1
      %p189 = scmp.eq.s32.totalorder %s25, 1
      %p190 = scmp.ne.s32.totalorder %s185, %s187
      %p191 = scmp.eq.s32.totalorder %s25, 0
      %p192 = por %p190, %p191
      %p193 = scmp.ne.s32.totalorder %s185, %s187
      %p194 = scmp.eq.s32.totalorder %s30, 1
      %p195 = por %p193, %p194
      %p196 = scmp.ne.s32.totalorder %s187, %s188
      %p197 = scmp.eq.s32.totalorder %s30, 0
      %p198 = por %p196, %p197
      %p199 = scmp.ne.s32.totalorder %s187, %s188
      %p200 = scmp.eq.s32.totalorder %s31, 1
      %p201 = por %p199, %p200
      %p203 = scmp.ne.s32.totalorder %s188, %s202
      %p204 = scmp.eq.s32.totalorder %s31, 0
      %p205 = por %p203, %p204
      %s207 = sadd.s32 %s206, 1
      %p210 = scmp.eq.s32.totalorder %s25, 1
      %p211 = scmp.ne.s32.totalorder %s206, %s208
      %p212 = scmp.eq.s32.totalorder %s25, 0
      %p213 = por %p211, %p212
      %p214 = scmp.ne.s32.totalorder %s206, %s208
      %p215 = scmp.eq.s32.totalorder %s30, 1
      %p216 = por %p214, %p215
      %p217 = scmp.ne.s32.totalorder %s208, %s209
      %p218 = scmp.eq.s32.totalorder %s30, 0
      %p219 = por %p217, %p218
      %p220 = scmp.ne.s32.totalorder %s208, %s209
      %p221 = scmp.eq.s32.totalorder %s31, 1
      %p222 = por %p220, %p221
      %p224 = scmp.ne.s32.totalorder %s209, %s223
      %p225 = scmp.eq.s32.totalorder %s31, 0
      %p226 = por %p224, %p225
      %s228 = sadd.s32 %s227, 1
      %p231 = scmp.eq.s32.totalorder %s25, 1
      %p232 = scmp.ne.s32.totalorder %s227, %s229
      %p233 = scmp.eq.s32.totalorder %s25, 0
      %p234 = por %p232, %p233
      %p235 = scmp.ne.s32.totalorder %s227, %s229
      %p236 = scmp.eq.s32.totalorder %s30, 1
      %p237 = por %p235, %p236
      %p238 = scmp.ne.s32.totalorder %s229, %s230
      %p239 = scmp.eq.s32.totalorder %s30, 0
      %p240 = por %p238, %p239
      %p241 = scmp.ne.s32.totalorder %s229, %s230
      %p242 = scmp.eq.s32.totalorder %s31, 1
      %p243 = por %p241, %p242
      %p245 = scmp.ne.s32.totalorder %s230, %s244
      %p246 = scmp.eq.s32.totalorder %s31, 0
      %p247 = por %p245, %p246
      %s249 = sadd.s32 %s248, 1
      %p252 = scmp.eq.s32.totalorder %s25, 1
      %p253 = scmp.ne.s32.totalorder %s248, %s250
      %p254 = scmp.eq.s32.totalorder %s25, 0
      %p255 = por %p253, %p254
      %p256 = scmp.ne.s32.totalorder %s248, %s250
      %p257 = scmp.eq.s32.totalorder %s30, 1
      %p258 = por %p256, %p257
      %p259 = scmp.ne.s32.totalorder %s250, %s251
      %p260 = scmp.eq.s32.totalorder %s30, 0
      %p261 = por %p259, %p260
      %p262 = scmp.ne.s32.totalorder %s250, %s251
      %p263 = scmp.eq.s32.totalorder %s31, 1
      %p264 = por %p262, %p263
      %p266 = scmp.ne.s32.totalorder %s251, %s265
      %p267 = scmp.eq.s32.totalorder %s31, 0
      %p268 = por %p266, %p267
      %s270 = sadd.s32 %s269, 1
      %p273 = scmp.eq.s32.totalorder %s25, 1
      %p274 = scmp.ne.s32.totalorder %s269, %s271
      %p275 = scmp.eq.s32.totalorder %s25, 0
      %p276 = por %p274, %p275
      %p277 = scmp.ne.s32.totalorder %s269, %s271
      %p278 = scmp.eq.s32.totalorder %s30, 1
      %p279 = por %p277, %p278
      %p280 = scmp.ne.s32.totalorder %s271, %s272
      %p281 = scmp.eq.s32.totalorder %s30, 0
      %p282 = por %p280, %p281
      %p283 = scmp.ne.s32.totalorder %s271, %s272
      %p284 = scmp.eq.s32.totalorder %s31, 1
      %p285 = por %p283, %p284
      %p287 = scmp.ne.s32.totalorder %s272, %s286
      %p288 = scmp.eq.s32.totalorder %s31, 0
      %p289 = por %p287, %p288
      %s291 = sadd.s32 %s290, 1
      %p294 = scmp.eq.s32.totalorder %s25, 1
      %p295 = scmp.ne.s32.totalorder %s290, %s292
      %p296 = scmp.eq.s32.totalorder %s25, 0
      %p297 = por %p295, %p296
      %p298 = scmp.ne.s32.totalorder %s290, %s292
      %p299 = scmp.eq.s32.totalorder %s30, 1
      %p300 = por %p298, %p299
      %p301 = scmp.ne.s32.totalorder %s292, %s293
      %p302 = scmp.eq.s32.totalorder %s30, 0
      %p303 = por %p301, %p302
      %p304 = scmp.ne.s32.totalorder %s292, %s293
      %p305 = scmp.eq.s32.totalorder %s31, 1
      %p306 = por %p304, %p305
      %p308 = scmp.ne.s32.totalorder %s293, %s307
      %p309 = scmp.eq.s32.totalorder %s31, 0
      %p310 = por %p308, %p309
      %s312 = sadd.s32 %s311, 1
      %p315 = scmp.eq.s32.totalorder %s25, 1
      %p316 = scmp.ne.s32.totalorder %s311, %s313
      %p317 = scmp.eq.s32.totalorder %s25, 0
      %p318 = por %p316, %p317
      %p319 = scmp.ne.s32.totalorder %s311, %s313
      %p320 = scmp.eq.s32.totalorder %s30, 1
      %p321 = por %p319, %p320
      %p322 = scmp.ne.s32.totalorder %s313, %s314
      %p323 = scmp.eq.s32.totalorder %s30, 0
      %p324 = por %p322, %p323
      %p325 = scmp.ne.s32.totalorder %s313, %s314
      %p326 = scmp.eq.s32.totalorder %s31, 1
      %p327 = por %p325, %p326
      %p329 = scmp.ne.s32.totalorder %s314, %s328
      %p330 = scmp.eq.s32.totalorder %s31, 0
      %p331 = por %p329, %p330
      %s332 = ssub.s32 %s25, %s32
      %p333 = scmp.eq.s32.totalorder %s332, 0
      %s335 = sadd.s32 %s334, 1
      %s336 = scalar_select %p333, %s334, %s335
      %p339 = pneg %p333
      %p340 = scmp.eq.s32.totalorder %s25, 1
      %p341 = por %p339, %p340
      %p342 = scmp.ne.s32.totalorder %s334, %s337
      %p343 = scmp.eq.s32.totalorder %s25, 0
      %p344 = por %p342, %p343
      %p345 = scmp.ne.s32.totalorder %s334, %s337
      %p346 = scmp.eq.s32.totalorder %s30, 1
      %p347 = por %p345, %p346
      %p348 = scmp.ne.s32.totalorder %s337, %s338
      %p349 = scmp.eq.s32.totalorder %s30, 0
      %p350 = por %p348, %p349
      %p351 = scmp.ne.s32.totalorder %s337, %s338
      %p352 = scmp.eq.s32.totalorder %s31, 1
      %p353 = por %p351, %p352
      %p355 = scmp.ne.s32.totalorder %s338, %s354
      %p356 = scmp.eq.s32.totalorder %s31, 0
      %p357 = por %p355, %p356
      %p358 = scmp.le.s32.totalorder 1, %s25
      %p359 = scmp.lt.s32.totalorder %s25, 3
      %p360 = pnand %p358, %p359
      %p361 = pneg %p360
      // Predicated region
      $region9: #{tpu_custom_call.1} parent=5 // pred_check
        _
      $region10: #{tpu_custom_call.1} parent=5 // pred_check_branch
        %363 = sbr.rel (%p360) target = $region12
      $region11: #{tpu_custom_call.1} parent=5 // pred_region
        %s364 = ssub.s32 %s25, 1
        // Predicated region
        $region13: #{tpu_custom_call.1} parent=11 // pred_check
          %p365 = pneg %p72
        $region14: #{tpu_custom_call.1} parent=11 // pred_check_branch
          %367 = sbr.rel (%p365) target = $region16
        $region15: #{tpu_custom_call.1} parent=11 // pred_region
          %369 = vsyncadd [#allocation4], 0
          %s371 = sshll.u32 %s1, 4
          %s372 = int_to_ptr.hbm [resolvable:$true] %s371
          %s373 = sshll.u32 [#allocation3], 4
          %s374 = int_to_ptr.vmem [resolvable:$true] %s373
          %376 = dma.hbm_to_vmem [thread:$0]  %s372, 256, %s374, [#allocation4]
        $region16: #{tpu_custom_call.1} parent=11 // pred_fallthru
          _
        // Predicated region
        $region17: #{tpu_custom_call.1} parent=11 // pred_check
          %p377 = pneg %p93
        $region18: #{tpu_custom_call.1} parent=11 // pred_check_branch
          %379 = sbr.rel (%p377) target = $region20
        $region19: #{tpu_custom_call.1} parent=11 // pred_region
          _
        $region20: #{tpu_custom_call.1} parent=11 // pred_fallthru
          _
        // Predicated region
        $region21: #{tpu_custom_call.1} parent=11 // pred_check
          %p380 = pneg %p114
        $region22: #{tpu_custom_call.1} parent=11 // pred_check_branch
          %382 = sbr.rel (%p380) target = $region24
        $region23: #{tpu_custom_call.1} parent=11 // pred_region
          _
        $region24: #{tpu_custom_call.1} parent=11 // pred_fallthru
          _
        // Predicated region
        $region25: #{tpu_custom_call.1} parent=11 // pred_check
          %p383 = pneg %p135
        $region26: #{tpu_custom_call.1} parent=11 // pred_check_branch
          %385 = sbr.rel (%p383) target = $region28
        $region27: #{tpu_custom_call.1} parent=11 // pred_region
          _
        $region28: #{tpu_custom_call.1} parent=11 // pred_fallthru
          _
        // Predicated region
        $region29: #{tpu_custom_call.1} parent=11 // pred_check
          %p386 = pneg %p156
        $region30: #{tpu_custom_call.1} parent=11 // pred_check_branch
          %388 = sbr.rel (%p386) target = $region32
        $region31: #{tpu_custom_call.1} parent=11 // pred_region
          %390 = vsyncadd [#allocation7], 0
          %s392 = sshll.u32 %s5, 4
          %s393 = int_to_ptr.hbm [resolvable:$true] %s392
          %s394 = sshll.u32 [#allocation6], 4
          %s395 = int_to_ptr.vmem [resolvable:$true] %s394
          %397 = dma.hbm_to_vmem [thread:$0]  %s393, 256, %s395, [#allocation7]
        $region32: #{tpu_custom_call.1} parent=11 // pred_fallthru
          _
        // Predicated region
        $region33: #{tpu_custom_call.1} parent=11 // pred_check
          %p398 = pneg %p177
        $region34: #{tpu_custom_call.1} parent=11 // pred_check_branch
          %400 = sbr.rel (%p398) target = $region36
        $region35: #{tpu_custom_call.1} parent=11 // pred_region
          _
        $region36: #{tpu_custom_call.1} parent=11 // pred_fallthru
          _
        // Predicated region
        $region37: #{tpu_custom_call.1} parent=11 // pred_check
          %p401 = pneg %p198
        $region38: #{tpu_custom_call.1} parent=11 // pred_check_branch
          %403 = sbr.rel (%p401) target = $region40
        $region39: #{tpu_custom_call.1} parent=11 // pred_region
          _
        $region40: #{tpu_custom_call.1} parent=11 // pred_fallthru
          _
        // Predicated region
        $region41: #{tpu_custom_call.1} parent=11 // pred_check
          %p404 = pneg %p219
        $region42: #{tpu_custom_call.1} parent=11 // pred_check_branch
          %406 = sbr.rel (%p404) target = $region44
        $region43: #{tpu_custom_call.1} parent=11 // pred_region
          _
        $region44: #{tpu_custom_call.1} parent=11 // pred_fallthru
          _
        // Predicated region
        $region45: #{tpu_custom_call.1} parent=11 // pred_check
          %p407 = pneg %p240
        $region46: #{tpu_custom_call.1} parent=11 // pred_check_branch
          %409 = sbr.rel (%p407) target = $region48
        $region47: #{tpu_custom_call.1} parent=11 // pred_region
          _
        $region48: #{tpu_custom_call.1} parent=11 // pred_fallthru
          _
        // Predicated region
        $region49: #{tpu_custom_call.1} parent=11 // pred_check
          %p410 = pneg %p261
        $region50: #{tpu_custom_call.1} parent=11 // pred_check_branch
          %412 = sbr.rel (%p410) target = $region52
        $region51: #{tpu_custom_call.1} parent=11 // pred_region
          _
        $region52: #{tpu_custom_call.1} parent=11 // pred_fallthru
          _
        // Predicated region
        $region53: #{tpu_custom_call.1} parent=11 // pred_check
          %p413 = pneg %p282
        $region54: #{tpu_custom_call.1} parent=11 // pred_check_branch
          %415 = sbr.rel (%p413) target = $region56
        $region55: #{tpu_custom_call.1} parent=11 // pred_region
          %417 = vsyncadd [#allocation7], 0
          %s419 = sshll.u32 %s11, 4
          %s420 = int_to_ptr.hbm [resolvable:$true] %s419
          %s421 = sshll.u32 [#allocation8], 4
          %s422 = int_to_ptr.vmem [resolvable:$true] %s421
          %424 = dma.hbm_to_vmem [thread:$0]  %s420, 256, %s422, [#allocation7]
        $region56: #{tpu_custom_call.1} parent=11 // pred_fallthru
          _
        // Predicated region
        $region57: #{tpu_custom_call.1} parent=11 // pred_check
          %p425 = pneg %p303
        $region58: #{tpu_custom_call.1} parent=11 // pred_check_branch
          %427 = sbr.rel (%p425) target = $region60
        $region59: #{tpu_custom_call.1} parent=11 // pred_region
          _
        $region60: #{tpu_custom_call.1} parent=11 // pred_fallthru
          _
        // Predicated region
        $region61: #{tpu_custom_call.1} parent=11 // pred_check
          %p428 = pneg %p324
        $region62: #{tpu_custom_call.1} parent=11 // pred_check_branch
          %430 = sbr.rel (%p428) target = $region64
        $region63: #{tpu_custom_call.1} parent=11 // pred_region
          _
        $region64: #{tpu_custom_call.1} parent=11 // pred_fallthru
          _
      $region12: #{tpu_custom_call.1} parent=5 // pred_fallthru
        _
      %p431 = scmp.lt.s32.totalorder %s25, 2
      // Predicated region
      $region65: #{tpu_custom_call.1} parent=5 // pred_check
        %p432 = pneg %p431
      $region66: #{tpu_custom_call.1} parent=5 // pred_check_branch
        %434 = sbr.rel (%p432) target = $region68
      $region67: #{tpu_custom_call.1} parent=5 // pred_region
        // Predicated region
        $region69: #{tpu_custom_call.1} parent=67 // pred_check
          %p435 = pneg %p45
        $region70: #{tpu_custom_call.1} parent=67 // pred_check_branch
          %437 = sbr.rel (%p435) target = $region72
        $region71: #{tpu_custom_call.1} parent=67 // pred_region
          %p438 = scmp.lt.s32.totalorder %s25, 1
          %s439 = scalar_select %p438, %s25, 1
          %s440 = smul.addr %s439, 2
          %s441 = smul.addr %s440, 4
          %s442 = scalar_lea.vmem %s0, %s441
        $region72: #{tpu_custom_call.1} parent=67 // pred_fallthru
          _
      $region68: #{tpu_custom_call.1} parent=5 // pred_fallthru
        _
      %p443 = scmp.le.s32.totalorder 1, %s25
      %p444 = scmp.lt.s32.totalorder %s25, 3
      %p445 = pnand %p443, %p444
      %p446 = pneg %p445
      // Predicated region
      $region73: #{tpu_custom_call.1} parent=5 // pred_check
        _
      $region74: #{tpu_custom_call.1} parent=5 // pred_check_branch
        %448 = sbr.rel (%p445) target = $region76
      $region75: #{tpu_custom_call.1} parent=5 // pred_region
        %s449 = ssub.s32 %s25, 1
        // Predicated region
        $region77: #{tpu_custom_call.1} parent=75 // pred_check
          %p450 = pneg %p72
        $region78: #{tpu_custom_call.1} parent=75 // pred_check_branch
          %452 = sbr.rel (%p450) target = $region80
        $region79: #{tpu_custom_call.1} parent=75 // pred_region
          %454 = dma.done [#allocation4], 256
        $region80: #{tpu_custom_call.1} parent=75 // pred_fallthru
          _
        // Predicated region
        $region81: #{tpu_custom_call.1} parent=75 // pred_check
          %p455 = pneg %p156
        $region82: #{tpu_custom_call.1} parent=75 // pred_check_branch
          %457 = sbr.rel (%p455) target = $region84
        $region83: #{tpu_custom_call.1} parent=75 // pred_region
          %459 = dma.done [#allocation7], 256
        $region84: #{tpu_custom_call.1} parent=75 // pred_fallthru
          _
        // Predicated region
        $region85: #{tpu_custom_call.1} parent=75 // pred_check
          %p460 = pneg %p282
        $region86: #{tpu_custom_call.1} parent=75 // pred_check_branch
          %462 = sbr.rel (%p460) target = $region88
        $region87: #{tpu_custom_call.1} parent=75 // pred_region
          %464 = dma.done [#allocation7], 256
        $region88: #{tpu_custom_call.1} parent=75 // pred_fallthru
          _
        %p465 = scmp.lt.s32.totalorder %s30, 1
        %s466 = scalar_select %p465, %s30, 1
        %s467 = smul.addr %s466, 2
        %s468 = smul.addr %s467, 4
        %s469 = scalar_lea.vmem %s0, %s468
        %p470 = pneg %p51
        %p471 = pneg %p48
        %p472 = pneg %p72
        %p473 = pneg %p69
        %p474 = pneg %p93
        %p475 = pneg %p90
        %p476 = pneg %p114
        %p477 = pneg %p111
        %p478 = pneg %p135
        %p479 = pneg %p132
        %p480 = pneg %p156
        %p481 = pneg %p153
        %p482 = pneg %p177
        %p483 = pneg %p174
        %p484 = pneg %p198
        %p485 = pneg %p195
        %p486 = pneg %p219
        %p487 = pneg %p216
        %p488 = pneg %p240
        %p489 = pneg %p237
        %p490 = pneg %p261
        %p491 = pneg %p258
        %p492 = pneg %p282
        %p493 = pneg %p279
        %p494 = pneg %p303
        %p495 = pneg %p300
        %p496 = pneg %p324
        %p497 = pneg %p321
        %p498 = pneg %p350
        %p499 = pneg %p347
        %s500 = sand.u32 %s337, 1
        %s501 = scalar_lea.sflag [#allocation5], %s500
        %s502 = sand.u32 %s337, 1
        %s503 = smul.addr %s502, 8
        %s504 = scalar_lea.vmem [#allocation9], %s503
        %p505 = scmp.lt.s32.totalorder %s30, 1
        %s506 = scalar_select %p505, %s30, 1
        %s507 = smul.addr %s506, 2
        %s508 = smul.addr %s507, 4
        %s509 = scalar_lea.vmem %s0, %s508
        %v510 = vld [vmem:[%s509] sm:$0xff]
        %v511 = vld [vmem:[%s2] sm:$0xff]
        %v512 = vld [vmem:[%s3] sm:$0xff]
        %514 = vset.pattern.permute.xlu0 0
        %515 = vperm.xlu0 %514, %v512
        %v516 = vpop.permute.xlu0 %515
        %519 = vst [vmem:[#allocation1] ss:$2 sm:$0xff] %v510
        %v520 = vld.sshfl [vmem:[#allocation1] sm:$0xff pattern:$0x75316420]
        %v521 = vld.sshfl [vmem:[#allocation1 + $0x8] sm:$0xff pattern:$0x75316420]
        %vm522 = vcmask 31744
        %v524 = vsel %vm522, %v511, 0
        %vm526 = vcmask 1043456
        %v527 = vsel %vm526, %v520, 0
        %v529 = vsel %vm526, %v521, 0
        %531 = vmatpush.msra.mxu0 0.0
        %532 = vmatpush.msra.mxu0 0.0
        %533 = vmatpush.msra.mxu0 0.0
        %534 = vmatpush.msra.mxu0 0.0
        %535 = vmatpush.msra.mxu0 0.0
        %536 = vmatpush.msra.mxu0 0.0
        %537 = vmatpush.msra.mxu0 0.0
        %538 = vmatpush.msra.mxu0 0.0
        %539 = vmatpush.msra.mxu0 0.0
        %540 = vmatpush.msra.mxu0 0.0
        %541 = vmatpush.msra.mxu0 0.0
        %542 = vmatpush.msra.mxu0 0.0
        %543 = vmatpush.msra.mxu0 0.0
        %544 = vmatpush.msra.mxu0 0.0
        %545 = vmatpush.msra.mxu0 0.0
        %546 = vmatpush.msra.mxu0 %v527
        %547 = vmatmul.f32.gmra.mxu0 %v524
        %v548 = vpop.f32.mrf.mxu0
        %v549 = vadd.f32 %v516, %v548
        %550 = vdwg.mxu0
        %551 = vmatpush.msra.mxu0 0.0
        %552 = vmatpush.msra.mxu0 0.0
        %553 = vmatpush.msra.mxu0 0.0
        %554 = vmatpush.msra.mxu0 0.0
        %555 = vmatpush.msra.mxu0 0.0
        %556 = vmatpush.msra.mxu0 0.0
        %557 = vmatpush.msra.mxu0 0.0
        %558 = vmatpush.msra.mxu0 0.0
        %559 = vmatpush.msra.mxu0 0.0
        %560 = vmatpush.msra.mxu0 0.0
        %561 = vmatpush.msra.mxu0 0.0
        %562 = vmatpush.msra.mxu0 0.0
        %563 = vmatpush.msra.mxu0 0.0
        %564 = vmatpush.msra.mxu0 0.0
        %565 = vmatpush.msra.mxu0 0.0
        %566 = vmatpush.msra.mxu0 %v529
        %567 = vmatmul.f32.gmra.mxu0 %v524
        %v568 = vpop.f32.mrf.mxu0
        %v569 = vadd.f32 %v516, %v568
        %570 = vdwg.mxu0
        %v571 = vld [vmem:[#allocation3] ss:$8 sm:$0x3]
        %572 = vrot.lane.b32.xlu0 %v549, 17
        %v573 = vpop.permute.xlu0 %572
        %574 = vrot.lane.b32.xlu0 %v569, 17
        %v575 = vpop.permute.xlu0 %574
        %v576 = vlaneseq
        %v577 = vand.u32 %v576, 127
        %vm578 = vcmp.lt.s32.totalorder %v577, 17
        %v579 = vsel %vm578, %v573, %v575
        %v580 = vsel %vm578, %v575, %v573
        %v582 = vperm.slane %v571, 0
        %v583 = vperm.slane %v571, 1
        %v586 = vmul.f32 %v580, %v582
        %v587 = vmul.f32 %v579, %v583
        %588 = vst [vmem:[#allocation2] sm:$0xff] %v586
        %589 = vst [vmem:[#allocation2 + $0x8] sm:$0xff] %v587
        %s590 = scalar_lea.vmem [#allocation3], 1
        %v591 = vld [vmem:[%s590] ss:$8 sm:$0x3]
        %592 = vrot.lane.b32.xlu0 %v549, 16
        %v593 = vpop.permute.xlu0 %592
        %594 = vrot.lane.b32.xlu0 %v569, 16
        %v595 = vpop.permute.xlu0 %594
        %vm596 = vcmp.lt.s32.totalorder %v577, 16
        %v597 = vsel %vm596, %v593, %v595
        %v598 = vsel %vm596, %v595, %v593
        %v600 = vperm.slane %v591, 0
        %v601 = vperm.slane %v591, 1
        %v604 = vmul.f32 %v598, %v600
        %v605 = vmul.f32 %v597, %v601
        %606 = vst [vmem:[#allocation2 + $0x10] sm:$0xff] %v604
        %607 = vst [vmem:[#allocation2 + $0x18] sm:$0xff] %v605
        %s608 = scalar_lea.vmem [#allocation3], 2
        %v609 = vld [vmem:[%s608] ss:$8 sm:$0x3]
        %610 = vrot.lane.b32.xlu0 %v549, 15
        %v611 = vpop.permute.xlu0 %610
        %612 = vrot.lane.b32.xlu0 %v569, 15
        %v613 = vpop.permute.xlu0 %612
        %vm614 = vcmp.lt.s32.totalorder %v577, 15
        %v615 = vsel %vm614, %v611, %v613
        %v616 = vsel %vm614, %v613, %v611
        %v618 = vperm.slane %v609, 0
        %v619 = vperm.slane %v609, 1
        %v622 = vmul.f32 %v616, %v618
        %v623 = vmul.f32 %v615, %v619
        %624 = vst [vmem:[#allocation2 + $0x20] sm:$0xff] %v622
        %625 = vst [vmem:[#allocation2 + $0x28] sm:$0xff] %v623
        %s626 = scalar_lea.vmem [#allocation3], 3
        %v627 = vld [vmem:[%s626] ss:$8 sm:$0x3]
        %628 = vrot.lane.b32.xlu0 %v549, 1
        %v629 = vpop.permute.xlu0 %628
        %630 = vrot.lane.b32.xlu0 %v569, 1
        %v631 = vpop.permute.xlu0 %630
        %vm632 = vcmp.lt.s32.totalorder %v577, 1
        %v633 = vsel %vm632, %v629, %v631
        %v634 = vsel %vm632, %v631, %v629
        %v636 = vperm.slane %v627, 0
        %v637 = vperm.slane %v627, 1
        %v640 = vmul.f32 %v634, %v636
        %v641 = vmul.f32 %v633, %v637
        %642 = vst [vmem:[#allocation2 + $0x30] sm:$0xff] %v640
        %643 = vst [vmem:[#allocation2 + $0x38] sm:$0xff] %v641
        %644 = vst [vmem:[#allocation2 + $0x40] sm:$0xff] %v549
        %645 = vst [vmem:[#allocation2 + $0x48] sm:$0xff] %v569
        %s646 = scalar_lea.vmem [#allocation3], 4
        %v647 = vld [vmem:[%s646] ss:$8 sm:$0x3]
        %648 = vrot.lane.b32.xlu0 %v549, 127
        %v649 = vpop.permute.xlu0 %648
        %650 = vrot.lane.b32.xlu0 %v569, 127
        %v651 = vpop.permute.xlu0 %650
        %vm652 = vcmp.lt.s32.totalorder %v577, 127
        %v653 = vsel %vm652, %v649, %v651
        %v654 = vsel %vm652, %v651, %v649
        %v656 = vperm.slane %v647, 0
        %v657 = vperm.slane %v647, 1
        %v660 = vmul.f32 %v653, %v656
        %v661 = vmul.f32 %v654, %v657
        %662 = vst [vmem:[#allocation2 + $0x50] sm:$0xff] %v660
        %663 = vst [vmem:[#allocation2 + $0x58] sm:$0xff] %v661
        %s664 = scalar_lea.vmem [#allocation3], 5
        %v665 = vld [vmem:[%s664] ss:$8 sm:$0x3]
        %666 = vrot.lane.b32.xlu0 %v549, 113
        %v667 = vpop.permute.xlu0 %666
        %668 = vrot.lane.b32.xlu0 %v569, 113
        %v669 = vpop.permute.xlu0 %668
        %vm670 = vcmp.lt.s32.totalorder %v577, 113
        %v671 = vsel %vm670, %v667, %v669
        %v672 = vsel %vm670, %v669, %v667
        %v674 = vperm.slane %v665, 0
        %v675 = vperm.slane %v665, 1
        %v678 = vmul.f32 %v671, %v674
        %v679 = vmul.f32 %v672, %v675
        %680 = vst [vmem:[#allocation2 + $0x60] sm:$0xff] %v678
        %681 = vst [vmem:[#allocation2 + $0x68] sm:$0xff] %v679
        %s682 = scalar_lea.vmem [#allocation3], 6
        %v683 = vld [vmem:[%s682] ss:$8 sm:$0x3]
        %684 = vrot.lane.b32.xlu0 %v549, 112
        %v685 = vpop.permute.xlu0 %684
        %686 = vrot.lane.b32.xlu0 %v569, 112
        %v687 = vpop.permute.xlu0 %686
        %vm688 = vcmp.lt.s32.totalorder %v577, 112
        %v689 = vsel %vm688, %v685, %v687
        %v690 = vsel %vm688, %v687, %v685
        %v692 = vperm.slane %v683, 0
        %v693 = vperm.slane %v683, 1
        %v696 = vmul.f32 %v689, %v692
        %v697 = vmul.f32 %v690, %v693
        %698 = vst [vmem:[#allocation2 + $0x70] sm:$0xff] %v696
        %699 = vst [vmem:[#allocation2 + $0x78] sm:$0xff] %v697
        %s700 = scalar_lea.vmem [#allocation3], 7
        %v701 = vld [vmem:[%s700] ss:$8 sm:$0x3]
        %702 = vrot.lane.b32.xlu0 %v549, 111
        %v703 = vpop.permute.xlu0 %702
        %704 = vrot.lane.b32.xlu0 %v569, 111
        %v705 = vpop.permute.xlu0 %704
        %vm706 = vcmp.lt.s32.totalorder %v577, 111
        %v707 = vsel %vm706, %v703, %v705
        %v708 = vsel %vm706, %v705, %v703
        %v710 = vperm.slane %v701, 0
        %v711 = vperm.slane %v701, 1
        %v714 = vmul.f32 %v707, %v710
        %v715 = vmul.f32 %v708, %v711
        %716 = vst [vmem:[#allocation2 + $0x80] sm:$0xff] %v714
        %717 = vst [vmem:[#allocation2 + $0x88] sm:$0xff] %v715
        %v718 = vld [vmem:[%s4] sm:$0xff]
        %v719 = vld [vmem:[#allocation2] sm:$0xff]
        %v720 = vld [vmem:[#allocation2 + $0x8] sm:$0xff]
        %v721 = vld [vmem:[#allocation2 + $0x10] sm:$0xff]
        %v722 = vld [vmem:[#allocation2 + $0x18] sm:$0xff]
        %v723 = vld [vmem:[#allocation2 + $0x20] sm:$0xff]
        %v724 = vld [vmem:[#allocation2 + $0x28] sm:$0xff]
        %v725 = vld [vmem:[#allocation2 + $0x30] sm:$0xff]
        %v726 = vld [vmem:[#allocation2 + $0x38] sm:$0xff]
        %v727 = vld [vmem:[#allocation2 + $0x40] sm:$0xff]
        %v728 = vld [vmem:[#allocation2 + $0x48] sm:$0xff]
        %v729 = vld [vmem:[#allocation2 + $0x50] sm:$0xff]
        %v730 = vld [vmem:[#allocation2 + $0x58] sm:$0xff]
        %v731 = vld [vmem:[#allocation2 + $0x60] sm:$0xff]
        %v732 = vld [vmem:[#allocation2 + $0x68] sm:$0xff]
        %v733 = vld [vmem:[#allocation2 + $0x70] sm:$0xff]
        %v734 = vld [vmem:[#allocation2 + $0x78] sm:$0xff]
        %v735 = vld [vmem:[#allocation2 + $0x80] sm:$0xff]
        %v736 = vld [vmem:[#allocation2 + $0x88] sm:$0xff]
        %v737 = vld [vmem:[#allocation6] sm:$0xff]
        %v738 = vld [vmem:[#allocation6 + $0x8] sm:$0xff]
        %vm739 = vcmask 588800
        %v741 = vsel %vm739, %v718, 0
        %743 = vmatpush.msra.mxu0 0.0
        %744 = vmatpush.msra.mxu0 0.0
        %745 = vmatpush.msra.mxu0 0.0
        %746 = vmatpush.msra.mxu0 0.0
        %747 = vmatpush.msra.mxu0 0.0
        %748 = vmatpush.msra.mxu0 0.0
        %749 = vmatpush.msra.mxu0 0.0
        %750 = vmatpush.msra.mxu0 %v735
        %751 = vmatpush.msra.mxu0 %v733
        %752 = vmatpush.msra.mxu0 %v731
        %753 = vmatpush.msra.mxu0 %v729
        %754 = vmatpush.msra.mxu0 %v727
        %755 = vmatpush.msra.mxu0 %v725
        %756 = vmatpush.msra.mxu0 %v723
        %757 = vmatpush.msra.mxu0 %v721
        %758 = vmatpush.msra.mxu0 %v719
        %759 = vmatmul.f32.gmra.mxu0 %v741
        %v760 = vpop.f32.mrf.mxu0
        %v761 = vadd.f32 %v737, %v760
        %762 = vdwg.mxu0
        %763 = vmatpush.msra.mxu0 0.0
        %764 = vmatpush.msra.mxu0 0.0
        %765 = vmatpush.msra.mxu0 0.0
        %766 = vmatpush.msra.mxu0 0.0
        %767 = vmatpush.msra.mxu0 0.0
        %768 = vmatpush.msra.mxu0 0.0
        %769 = vmatpush.msra.mxu0 0.0
        %770 = vmatpush.msra.mxu0 %v736
        %771 = vmatpush.msra.mxu0 %v734
        %772 = vmatpush.msra.mxu0 %v732
        %773 = vmatpush.msra.mxu0 %v730
        %774 = vmatpush.msra.mxu0 %v728
        %775 = vmatpush.msra.mxu0 %v726
        %776 = vmatpush.msra.mxu0 %v724
        %777 = vmatpush.msra.mxu0 %v722
        %778 = vmatpush.msra.mxu0 %v720
        %779 = vmatmul.f32.gmra.mxu0 %v741
        %v780 = vpop.f32.mrf.mxu0
        %v781 = vadd.f32 %v738, %v780
        %782 = vdwg.mxu0
        %v783 = vld [vmem:[%s6] sm:$0xf]
        %v784 = vld [vmem:[%s7] sm:$0xf]
        %786 = vset.pattern.permute.xlu0 0
        %787 = vperm.xlu0 %786, %v784
        %v788 = vpop.permute.xlu0 %787
        %vm790 = vcmask 64512
        %v792 = vsel %vm790, %v783, 0
        %794 = vmatpush.msra.mxu0 0.0
        %795 = vmatpush.msra.mxu0 0.0
        %796 = vmatpush.msra.mxu0 0.0
        %797 = vmatpush.msra.mxu0 0.0
        %798 = vmatpush.msra.mxu0 0.0
        %799 = vmatpush.msra.mxu0 0.0
        %800 = vmatpush.msra.mxu0 0.0
        %801 = vmatpush.msra.mxu0 0.0
        %802 = vmatpush.msra.mxu0 0.0
        %803 = vmatpush.msra.mxu0 0.0
        %804 = vmatpush.msra.mxu0 0.0
        %805 = vmatpush.msra.mxu0 0.0
        %806 = vmatpush.msra.mxu0 0.0
        %807 = vmatpush.msra.mxu0 0.0
        %808 = vmatpush.msra.mxu0 0.0
        %809 = vmatpush.msra.mxu0 %v761
        %810 = vmatmul.f32.gmra.mxu0 %v792
        %v811 = vpop.f32.mrf.mxu0
        %v812 = vadd.f32 %v788, %v811
        %813 = vdwg.mxu0
        %814 = vmatpush.msra.mxu0 0.0
        %815 = vmatpush.msra.mxu0 0.0
        %816 = vmatpush.msra.mxu0 0.0
        %817 = vmatpush.msra.mxu0 0.0
        %818 = vmatpush.msra.mxu0 0.0
        %819 = vmatpush.msra.mxu0 0.0
        %820 = vmatpush.msra.mxu0 0.0
        %821 = vmatpush.msra.mxu0 0.0
        %822 = vmatpush.msra.mxu0 0.0
        %823 = vmatpush.msra.mxu0 0.0
        %824 = vmatpush.msra.mxu0 0.0
        %825 = vmatpush.msra.mxu0 0.0
        %826 = vmatpush.msra.mxu0 0.0
        %827 = vmatpush.msra.mxu0 0.0
        %828 = vmatpush.msra.mxu0 0.0
        %829 = vmatpush.msra.mxu0 %v781
        %830 = vmatmul.f32.gmra.mxu0 %v792
        %v831 = vpop.f32.mrf.mxu0
        %v832 = vadd.f32 %v788, %v831
        %833 = vdwg.mxu0
        %834 = vst [vmem:[#allocation1] ss:$2 sm:$0xff] %v510
        %v835 = vld.sshfl [vmem:[#allocation1] sm:$0xff pattern:$0x75316420]
        %v836 = vld.sshfl [vmem:[#allocation1 + $0x8] sm:$0xff pattern:$0x75316420]
        %v839 = vadd.f32 %v812, %v835
        %v840 = vadd.f32 %v832, %v836
        %vm841 = vcmp.ge.f32.partialorder %v839, 0.0
        %vm842 = vcmp.ge.f32.partialorder %v840, 0.0
        %v843 = vmul.f32 %v839, 0.1
        %v844 = vmul.f32 %v840, 0.1
        %v845 = vsel %vm841, %v839, %v843
        %v846 = vsel %vm842, %v840, %v844
        %v847 = vld [vmem:[%s8] sm:$0xff]
        %v848 = vld [vmem:[%s9] sm:$0xff]
        %850 = vset.pattern.permute.xlu0 0
        %851 = vperm.xlu0 %850, %v848
        %v852 = vpop.permute.xlu0 %851
        %v855 = vsel %vm522, %v847, 0
        %v858 = vsel %vm526, %v845, 0
        %v861 = vsel %vm526, %v846, 0
        %863 = vmatpush.msra.mxu0 0.0
        %864 = vmatpush.msra.mxu0 0.0
        %865 = vmatpush.msra.mxu0 0.0
        %866 = vmatpush.msra.mxu0 0.0
        %867 = vmatpush.msra.mxu0 0.0
        %868 = vmatpush.msra.mxu0 0.0
        %869 = vmatpush.msra.mxu0 0.0
        %870 = vmatpush.msra.mxu0 0.0
        %871 = vmatpush.msra.mxu0 0.0
        %872 = vmatpush.msra.mxu0 0.0
        %873 = vmatpush.msra.mxu0 0.0
        %874 = vmatpush.msra.mxu0 0.0
        %875 = vmatpush.msra.mxu0 0.0
        %876 = vmatpush.msra.mxu0 0.0
        %877 = vmatpush.msra.mxu0 0.0
        %878 = vmatpush.msra.mxu0 %v858
        %879 = vmatmul.f32.gmra.mxu0 %v855
        %v880 = vpop.f32.mrf.mxu0
        %v881 = vadd.f32 %v852, %v880
        %882 = vdwg.mxu0
        %883 = vmatpush.msra.mxu0 0.0
        %884 = vmatpush.msra.mxu0 0.0
        %885 = vmatpush.msra.mxu0 0.0
        %886 = vmatpush.msra.mxu0 0.0
        %887 = vmatpush.msra.mxu0 0.0
        %888 = vmatpush.msra.mxu0 0.0
        %889 = vmatpush.msra.mxu0 0.0
        %890 = vmatpush.msra.mxu0 0.0
        %891 = vmatpush.msra.mxu0 0.0
        %892 = vmatpush.msra.mxu0 0.0
        %893 = vmatpush.msra.mxu0 0.0
        %894 = vmatpush.msra.mxu0 0.0
        %895 = vmatpush.msra.mxu0 0.0
        %896 = vmatpush.msra.mxu0 0.0
        %897 = vmatpush.msra.mxu0 0.0
        %898 = vmatpush.msra.mxu0 %v861
        %899 = vmatmul.f32.gmra.mxu0 %v855
        %v900 = vpop.f32.mrf.mxu0
        %v901 = vadd.f32 %v852, %v900
        %902 = vdwg.mxu0
        %v903 = vld [vmem:[#allocation3] ss:$8 sm:$0x3]
        %904 = vrot.lane.b32.xlu0 %v881, 17
        %v905 = vpop.permute.xlu0 %904
        %906 = vrot.lane.b32.xlu0 %v901, 17
        %v907 = vpop.permute.xlu0 %906
        %v908 = vsel %vm578, %v905, %v907
        %v909 = vsel %vm578, %v907, %v905
        %v911 = vperm.slane %v903, 0
        %v912 = vperm.slane %v903, 1
        %v915 = vmul.f32 %v909, %v911
        %v916 = vmul.f32 %v908, %v912
        %917 = vst [vmem:[#allocation2] sm:$0xff] %v915
        %918 = vst [vmem:[#allocation2 + $0x8] sm:$0xff] %v916
        %v919 = vld [vmem:[%s590] ss:$8 sm:$0x3]
        %920 = vrot.lane.b32.xlu0 %v881, 16
        %v921 = vpop.permute.xlu0 %920
        %922 = vrot.lane.b32.xlu0 %v901, 16
        %v923 = vpop.permute.xlu0 %922
        %v924 = vsel %vm596, %v921, %v923
        %v925 = vsel %vm596, %v923, %v921
        %v927 = vperm.slane %v919, 0
        %v928 = vperm.slane %v919, 1
        %v931 = vmul.f32 %v925, %v927
        %v932 = vmul.f32 %v924, %v928
        %933 = vst [vmem:[#allocation2 + $0x10] sm:$0xff] %v931
        %934 = vst [vmem:[#allocation2 + $0x18] sm:$0xff] %v932
        %v935 = vld [vmem:[%s608] ss:$8 sm:$0x3]
        %936 = vrot.lane.b32.xlu0 %v881, 15
        %v937 = vpop.permute.xlu0 %936
        %938 = vrot.lane.b32.xlu0 %v901, 15
        %v939 = vpop.permute.xlu0 %938
        %v940 = vsel %vm614, %v937, %v939
        %v941 = vsel %vm614, %v939, %v937
        %v943 = vperm.slane %v935, 0
        %v944 = vperm.slane %v935, 1
        %v947 = vmul.f32 %v941, %v943
        %v948 = vmul.f32 %v940, %v944
        %949 = vst [vmem:[#allocation2 + $0x20] sm:$0xff] %v947
        %950 = vst [vmem:[#allocation2 + $0x28] sm:$0xff] %v948
        %v951 = vld [vmem:[%s626] ss:$8 sm:$0x3]
        %952 = vrot.lane.b32.xlu0 %v881, 1
        %v953 = vpop.permute.xlu0 %952
        %954 = vrot.lane.b32.xlu0 %v901, 1
        %v955 = vpop.permute.xlu0 %954
        %v956 = vsel %vm632, %v953, %v955
        %v957 = vsel %vm632, %v955, %v953
        %v959 = vperm.slane %v951, 0
        %v960 = vperm.slane %v951, 1
        %v963 = vmul.f32 %v957, %v959
        %v964 = vmul.f32 %v956, %v960
        %965 = vst [vmem:[#allocation2 + $0x30] sm:$0xff] %v963
        %966 = vst [vmem:[#allocation2 + $0x38] sm:$0xff] %v964
        %967 = vst [vmem:[#allocation2 + $0x40] sm:$0xff] %v881
        %968 = vst [vmem:[#allocation2 + $0x48] sm:$0xff] %v901
        %v969 = vld [vmem:[%s646] ss:$8 sm:$0x3]
        %970 = vrot.lane.b32.xlu0 %v881, 127
        %v971 = vpop.permute.xlu0 %970
        %972 = vrot.lane.b32.xlu0 %v901, 127
        %v973 = vpop.permute.xlu0 %972
        %v974 = vsel %vm652, %v971, %v973
        %v975 = vsel %vm652, %v973, %v971
        %v977 = vperm.slane %v969, 0
        %v978 = vperm.slane %v969, 1
        %v981 = vmul.f32 %v974, %v977
        %v982 = vmul.f32 %v975, %v978
        %983 = vst [vmem:[#allocation2 + $0x50] sm:$0xff] %v981
        %984 = vst [vmem:[#allocation2 + $0x58] sm:$0xff] %v982
        %v985 = vld [vmem:[%s664] ss:$8 sm:$0x3]
        %986 = vrot.lane.b32.xlu0 %v881, 113
        %v987 = vpop.permute.xlu0 %986
        %988 = vrot.lane.b32.xlu0 %v901, 113
        %v989 = vpop.permute.xlu0 %988
        %v990 = vsel %vm670, %v987, %v989
        %v991 = vsel %vm670, %v989, %v987
        %v993 = vperm.slane %v985, 0
        %v994 = vperm.slane %v985, 1
        %v997 = vmul.f32 %v990, %v993
        %v998 = vmul.f32 %v991, %v994
        %999 = vst [vmem:[#allocation2 + $0x60] sm:$0xff] %v997
        %1000 = vst [vmem:[#allocation2 + $0x68] sm:$0xff] %v998
        %v1001 = vld [vmem:[%s682] ss:$8 sm:$0x3]
        %1002 = vrot.lane.b32.xlu0 %v881, 112
        %v1003 = vpop.permute.xlu0 %1002
        %1004 = vrot.lane.b32.xlu0 %v901, 112
        %v1005 = vpop.permute.xlu0 %1004
        %v1006 = vsel %vm688, %v1003, %v1005
        %v1007 = vsel %vm688, %v1005, %v1003
        %v1009 = vperm.slane %v1001, 0
        %v1010 = vperm.slane %v1001, 1
        %v1013 = vmul.f32 %v1006, %v1009
        %v1014 = vmul.f32 %v1007, %v1010
        %1015 = vst [vmem:[#allocation2 + $0x70] sm:$0xff] %v1013
        %1016 = vst [vmem:[#allocation2 + $0x78] sm:$0xff] %v1014
        %v1017 = vld [vmem:[%s700] ss:$8 sm:$0x3]
        %1018 = vrot.lane.b32.xlu0 %v881, 111
        %v1019 = vpop.permute.xlu0 %1018
        %1020 = vrot.lane.b32.xlu0 %v901, 111
        %v1021 = vpop.permute.xlu0 %1020
        %v1022 = vsel %vm706, %v1019, %v1021
        %v1023 = vsel %vm706, %v1021, %v1019
        %v1025 = vperm.slane %v1017, 0
        %v1026 = vperm.slane %v1017, 1
        %v1029 = vmul.f32 %v1022, %v1025
        %v1030 = vmul.f32 %v1023, %v1026
        %1031 = vst [vmem:[#allocation2 + $0x80] sm:$0xff] %v1029
        %1032 = vst [vmem:[#allocation2 + $0x88] sm:$0xff] %v1030
        %v1033 = vld [vmem:[%s10] sm:$0xff]
        %v1034 = vld [vmem:[#allocation2] sm:$0xff]
        %v1035 = vld [vmem:[#allocation2 + $0x8] sm:$0xff]
        %v1036 = vld [vmem:[#allocation2 + $0x10] sm:$0xff]
        %v1037 = vld [vmem:[#allocation2 + $0x18] sm:$0xff]
        %v1038 = vld [vmem:[#allocation2 + $0x20] sm:$0xff]
        %v1039 = vld [vmem:[#allocation2 + $0x28] sm:$0xff]
        %v1040 = vld [vmem:[#allocation2 + $0x30] sm:$0xff]
        %v1041 = vld [vmem:[#allocation2 + $0x38] sm:$0xff]
        %v1042 = vld [vmem:[#allocation2 + $0x40] sm:$0xff]
        %v1043 = vld [vmem:[#allocation2 + $0x48] sm:$0xff]
        %v1044 = vld [vmem:[#allocation2 + $0x50] sm:$0xff]
        %v1045 = vld [vmem:[#allocation2 + $0x58] sm:$0xff]
        %v1046 = vld [vmem:[#allocation2 + $0x60] sm:$0xff]
        %v1047 = vld [vmem:[#allocation2 + $0x68] sm:$0xff]
        %v1048 = vld [vmem:[#allocation2 + $0x70] sm:$0xff]
        %v1049 = vld [vmem:[#allocation2 + $0x78] sm:$0xff]
        %v1050 = vld [vmem:[#allocation2 + $0x80] sm:$0xff]
        %v1051 = vld [vmem:[#allocation2 + $0x88] sm:$0xff]
        %v1052 = vld [vmem:[#allocation8] sm:$0xff]
        %v1053 = vld [vmem:[#allocation8 + $0x8] sm:$0xff]
        %v1055 = vsel %vm739, %v1033, 0
        %1057 = vmatpush.msra.mxu0 0.0
        %1058 = vmatpush.msra.mxu0 0.0
        %1059 = vmatpush.msra.mxu0 0.0
        %1060 = vmatpush.msra.mxu0 0.0
        %1061 = vmatpush.msra.mxu0 0.0
        %1062 = vmatpush.msra.mxu0 0.0
        %1063 = vmatpush.msra.mxu0 0.0
        %1064 = vmatpush.msra.mxu0 %v1050
        %1065 = vmatpush.msra.mxu0 %v1048
        %1066 = vmatpush.msra.mxu0 %v1046
        %1067 = vmatpush.msra.mxu0 %v1044
        %1068 = vmatpush.msra.mxu0 %v1042
        %1069 = vmatpush.msra.mxu0 %v1040
        %1070 = vmatpush.msra.mxu0 %v1038
        %1071 = vmatpush.msra.mxu0 %v1036
        %1072 = vmatpush.msra.mxu0 %v1034
        %1073 = vmatmul.f32.gmra.mxu0 %v1055
        %v1074 = vpop.f32.mrf.mxu0
        %v1075 = vadd.f32 %v1052, %v1074
        %1076 = vdwg.mxu0
        %1077 = vmatpush.msra.mxu0 0.0
        %1078 = vmatpush.msra.mxu0 0.0
        %1079 = vmatpush.msra.mxu0 0.0
        %1080 = vmatpush.msra.mxu0 0.0
        %1081 = vmatpush.msra.mxu0 0.0
        %1082 = vmatpush.msra.mxu0 0.0
        %1083 = vmatpush.msra.mxu0 0.0
        %1084 = vmatpush.msra.mxu0 %v1051
        %1085 = vmatpush.msra.mxu0 %v1049
        %1086 = vmatpush.msra.mxu0 %v1047
        %1087 = vmatpush.msra.mxu0 %v1045
        %1088 = vmatpush.msra.mxu0 %v1043
        %1089 = vmatpush.msra.mxu0 %v1041
        %1090 = vmatpush.msra.mxu0 %v1039
        %1091 = vmatpush.msra.mxu0 %v1037
        %1092 = vmatpush.msra.mxu0 %v1035
        %1093 = vmatmul.f32.gmra.mxu0 %v1055
        %v1094 = vpop.f32.mrf.mxu0
        %v1095 = vadd.f32 %v1053, %v1094
        %1096 = vdwg.mxu0
        %v1097 = vld [vmem:[%s12] sm:$0xf]
        %v1098 = vld [vmem:[%s13] sm:$0xf]
        %1100 = vset.pattern.permute.xlu0 0
        %1101 = vperm.xlu0 %1100, %v1098
        %v1102 = vpop.permute.xlu0 %1101
        %v1105 = vsel %vm790, %v1097, 0
        %1107 = vmatpush.msra.mxu0 0.0
        %1108 = vmatpush.msra.mxu0 0.0
        %1109 = vmatpush.msra.mxu0 0.0
        %1110 = vmatpush.msra.mxu0 0.0
        %1111 = vmatpush.msra.mxu0 0.0
        %1112 = vmatpush.msra.mxu0 0.0
        %1113 = vmatpush.msra.mxu0 0.0
        %1114 = vmatpush.msra.mxu0 0.0
        %1115 = vmatpush.msra.mxu0 0.0
        %1116 = vmatpush.msra.mxu0 0.0
        %1117 = vmatpush.msra.mxu0 0.0
        %1118 = vmatpush.msra.mxu0 0.0
        %1119 = vmatpush.msra.mxu0 0.0
        %1120 = vmatpush.msra.mxu0 0.0
        %1121 = vmatpush.msra.mxu0 0.0
        %1122 = vmatpush.msra.mxu0 %v1075
        %1123 = vmatmul.f32.gmra.mxu0 %v1105
        %v1124 = vpop.f32.mrf.mxu0
        %v1125 = vadd.f32 %v1102, %v1124
        %1126 = vdwg.mxu0
        %1127 = vmatpush.msra.mxu0 0.0
        %1128 = vmatpush.msra.mxu0 0.0
        %1129 = vmatpush.msra.mxu0 0.0
        %1130 = vmatpush.msra.mxu0 0.0
        %1131 = vmatpush.msra.mxu0 0.0
        %1132 = vmatpush.msra.mxu0 0.0
        %1133 = vmatpush.msra.mxu0 0.0
        %1134 = vmatpush.msra.mxu0 0.0
        %1135 = vmatpush.msra.mxu0 0.0
        %1136 = vmatpush.msra.mxu0 0.0
        %1137 = vmatpush.msra.mxu0 0.0
        %1138 = vmatpush.msra.mxu0 0.0
        %1139 = vmatpush.msra.mxu0 0.0
        %1140 = vmatpush.msra.mxu0 0.0
        %1141 = vmatpush.msra.mxu0 0.0
        %1142 = vmatpush.msra.mxu0 %v1095
        %1143 = vmatmul.f32.gmra.mxu0 %v1105
        %v1144 = vpop.f32.mrf.mxu0
        %v1145 = vadd.f32 %v1102, %v1144
        %1146 = vdwg.mxu0
        %v1147 = vadd.f32 %v1125, %v845
        %v1148 = vadd.f32 %v1145, %v846
        %v1151 = vrot.slane %v1148, 4
        %v1152 = vsel %vm526, %v1147, %v1151
        %1154 = vst [vmem:[%s504] sm:$0xff] %v1152
        %s1155 = sand.u32 %s337, 1
        %s1156 = scalar_lea.sflag [#allocation5], %s1155
        %s1157 = sand.u32 %s337, 1
        %s1158 = smul.addr %s1157, 8
        %s1159 = scalar_lea.vmem [#allocation9], %s1158
        // Predicated region
        $region89: #{tpu_custom_call.1} parent=75 // pred_check
          %p1160 = pneg %p347
        $region90: #{tpu_custom_call.1} parent=75 // pred_check_branch
          %1162 = sbr.rel (%p1160) target = $region92
        $region91: #{tpu_custom_call.1} parent=75 // pred_region
          %1164 = vsyncadd %s1156, 0
          %s1165 = smul.addr %s30, 2
          %s1166 = smul.addr %s1165, 4
          %s1167 = scalar_lea.hbm %s14, %s1166
          %s1169 = sshll.u32 %s1159, 4
          %s1170 = int_to_ptr.vmem [resolvable:$true] %s1169
          %s1171 = sshll.u32 %s1167, 4
          %s1172 = int_to_ptr.hbm [resolvable:$true] %s1171
          %1174 = dma.vmem_to_hbm [thread:$0]  %s1170, 128, %s1172, %s1156
        $region92: #{tpu_custom_call.1} parent=75 // pred_fallthru
          _
      $region76: #{tpu_custom_call.1} parent=5 // pred_fallthru
        _
      %p1175 = scmp.le.s32.totalorder 2, %s25
      // Predicated region
      $region93: #{tpu_custom_call.1} parent=5 // pred_check
        %p1176 = pneg %p1175
      $region94: #{tpu_custom_call.1} parent=5 // pred_check_branch
        %1178 = sbr.rel (%p1176) target = $region96
      $region95: #{tpu_custom_call.1} parent=5 // pred_region
        %s1179 = ssub.s32 %s25, 2
        // Predicated region
        $region97: #{tpu_custom_call.1} parent=95 // pred_check
          %p1180 = pneg %p353
        $region98: #{tpu_custom_call.1} parent=95 // pred_check_branch
          %1182 = sbr.rel (%p1180) target = $region100
        $region99: #{tpu_custom_call.1} parent=95 // pred_region
          %s1183 = sand.u32 %s338, 1
          %s1184 = scalar_lea.sflag [#allocation5], %s1183
          %s1185 = sand.u32 %s338, 1
          %s1186 = smul.addr %s1185, 8
          %s1187 = scalar_lea.vmem [#allocation9], %s1186
          %1189 = dma.done %s1184, 128
        $region100: #{tpu_custom_call.1} parent=95 // pred_fallthru
          _
      $region96: #{tpu_custom_call.1} parent=5 // pred_fallthru
        _
    $region6: #{tpu_custom_call.1} parent=1 // loop_footer
      %s29 = sadd.s32 1, %s25
    $region7: #{tpu_custom_call.1} parent=1 // loop_footer_branch
      %24 = sbr.rel target = $region3
    $region8: #{tpu_custom_call.1} parent=1 // loop_exit
      _
    %1190 = vsyncpa [#allocation4], 1
    %s1191 = scalar_lea.sflag [#allocation4], 1
    %1192 = vsyncpa %s1191, 1
    %1193 = vsyncpa [#allocation7], 1
    %1194 = vsyncpa [#allocation5], 1
    %s1195 = scalar_lea.sflag [#allocation5], 1
    %1196 = vsyncpa %s1195, 1

</llo_original>
